<compile_context>
chip_gen: v5e
topology: v5e:2x2
jax: 0.10.0
libtpu: 0.0.40
codegen_flags: <defaults>
</compile_context>

<pallas_src>
import functools
import math

import jax
import jax.numpy as jnp
from jax.experimental import pallas as pl
from jax.experimental.pallas import tpu as pltpu


def _transformer_block_kernel(x_ref, g1_ref, s1_ref,
                              wqkv_ref, wo_ref, bo_ref,
                              g2_ref, s2_ref,
                              wfc_ref, bfc_ref, wpr_ref, bpr_ref,
                              o_ref,
                              k_scr, v_scr,
                              *, n_heads, tq, tile_h):
    """One grid step = (batch row, query tile).  Full pre-LN transformer block:
       x = x + Attn(LN1(x));  x = x + FFN(LN2(x))   (dropout = identity)."""
    T = x_ref.shape[1]
    D = x_ref.shape[2]
    H = wfc_ref.shape[1]
    head_dim = D // n_heads
    eps = 1e-5

    qi = pl.program_id(1)
    q_start = pl.multiple_of(qi * tq, tq)

    def layer_norm(v, gamma, beta):
        mean = jnp.mean(v, axis=-1, keepdims=True)
        var = jnp.mean((v - mean) ** 2, axis=-1, keepdims=True)  # unbiased=False
        return (v - mean) * jax.lax.rsqrt(var + eps) * gamma + beta

    # ------- K / V for the whole row: computed once (qi == 0), reused by every
    # ------- query tile of this batch row via VMEM scratch.
    @pl.when(qi == 0)
    def _():
        x_full = x_ref[0].astype(jnp.float32)                         # (T, D)
        h_full = layer_norm(x_full, g1_ref[0], s1_ref[0]).astype(jnp.bfloat16)
        kv = jnp.dot(h_full, wqkv_ref[:, D:],
                     preferred_element_type=jnp.float32)              # (T, 2D)
        k = kv[:, :D].astype(jnp.bfloat16).reshape(T, n_heads, head_dim)
        v = kv[:, D:].astype(jnp.bfloat16).reshape(T, n_heads, head_dim)
        k_scr[...] = jnp.transpose(k, (1, 0, 2))                      # (nh, T, hd)
        v_scr[...] = jnp.transpose(v, (1, 0, 2))

    # ---------------- attention sub-layer (this query tile) ----------------
    x_q = x_ref[0, pl.ds(q_start, tq), :].astype(jnp.float32)         # (tq, D)
    h_q = layer_norm(x_q, g1_ref[0], s1_ref[0])

    scale = 1.0 / math.sqrt(head_dim)
    hq_b = (h_q * scale).astype(jnp.bfloat16)                          # fold 1/sqrt(d) into q

    q = jnp.dot(hq_b, wqkv_ref[:, :D], preferred_element_type=jnp.float32)   # (tq, D)
    q3 = jnp.transpose(q.astype(jnp.bfloat16).reshape(tq, n_heads, head_dim),
                       (1, 0, 2))                                      # (nh, tq, hd)

    # batched over heads: (nh, tq, T)
    scores = jnp.einsum('hqd,hkd->hqk', q3, k_scr[...],
                        preferred_element_type=jnp.float32)

    # additive causal mask built once for the whole query tile
    row = jax.lax.broadcasted_iota(jnp.int32, (tq, T), 0)
    col = jax.lax.broadcasted_iota(jnp.int32, (tq, T), 1)
    mask = jnp.where(col <= row + q_start, 0.0, -1e30).astype(jnp.float32)
    scores = scores + mask[None, :, :]

    m = jnp.max(scores, axis=-1, keepdims=True)
    p = jnp.exp(scores - m)
    denom = jnp.sum(p, axis=-1, keepdims=True)
    p = p * pl.reciprocal(denom, approx=True)
    # TODO(synk): attention-weight dropout omitted (drop_rate=0 / inference)

    ctx = jnp.einsum('hqk,hkd->hqd', p.astype(jnp.bfloat16), v_scr[...],
                     preferred_element_type=jnp.float32)               # (nh, tq, hd)
    ctx = jnp.transpose(ctx, (1, 0, 2)).reshape(tq, D)

    attn = jnp.dot(ctx.astype(jnp.bfloat16), wo_ref[...],
                   preferred_element_type=jnp.float32) + bo_ref[0]
    # TODO(synk): residual dropout omitted (identity at drop_rate=0 / eval)
    x1 = x_q + attn

    # ---------------- feed-forward sub-layer ----------------
    h2 = layer_norm(x1, g2_ref[0], s2_ref[0])
    h2_b = h2.astype(jnp.bfloat16)
    c_gelu = math.sqrt(2.0 / math.pi)

    ff = jnp.zeros((tq, D), jnp.float32)
    for c0 in range(0, H, tile_h):                                     # static chunk slices
        z = jnp.dot(h2_b, wfc_ref[:, c0:c0 + tile_h],
                    preferred_element_type=jnp.float32) + bfc_ref[0, c0:c0 + tile_h]
        # GELU (tanh approximation, as in the reference GPT implementation)
        z = 0.5 * z * (1.0 + jnp.tanh(c_gelu * (z + 0.044715 * z ** 3)))
        ff = ff + jnp.dot(z.astype(jnp.bfloat16), wpr_ref[c0:c0 + tile_h, :],
                          preferred_element_type=jnp.float32)
    ff = ff + bpr_ref[0]

    o_ref[0] = (x1 + ff).astype(o_ref.dtype)


def transformer_block(x, params, *, n_heads):
    B, T, D = x.shape
    H = params["w_fc"].shape[1]                                  # hidden = 4*D
    assert D % n_heads == 0
    head_dim = D // n_heads

    # Fuse Q|K|V weights into one (D, 3D) slab; all matmul weights go to the
    # MXU as bf16 (accumulation stays f32 inside the kernel).
    w_qkv = jnp.concatenate(
        [params["w_q"], params["w_k"], params["w_v"]], axis=1).astype(jnp.bfloat16)
    w_o = params["w_o"].astype(jnp.bfloat16)
    w_fc = params["w_fc"].astype(jnp.bfloat16)
    w_proj = params["w_proj"].astype(jnp.bfloat16)

    # Query-tile the sequence: bounds the (nh, tq, T) score tile.  The query
    # axis is sequential ("arbitrary") so K/V scratch can be reused across it.
    tq = T if (T <= 128 or T % 128 != 0) else 128
    n_qt = T // tq
    # FFN hidden-dim chunking keeps the (tq, tile_h) intermediate small.
    tile_h = H if (H <= 512 or H % 512 != 0) else 512

    kernel = functools.partial(_transformer_block_kernel,
                               n_heads=n_heads, tq=tq, tile_h=tile_h)

    def whole(shape):
        # whole (non-batched) parameter, identical at every grid step
        return pl.BlockSpec(shape, lambda b, qi: (0,) * len(shape))

    in_specs = [
        # x: full sequence of one batch row; index_map ignores qi, so the DMA
        # only happens when the batch row changes.
        pl.BlockSpec((1, T, D), lambda b, qi: (b, 0, 0)),
        whole((1, D)), whole((1, D)),                      # ln1 scale / shift
        whole((D, 3 * D)),                                 # fused Wqkv (bf16)
        whole((D, D)), whole((1, D)),                      # Wo (bf16), bo
        whole((1, D)), whole((1, D)),                      # ln2 scale / shift
        whole((D, H)), whole((1, H)),                      # W_fc (bf16), b_fc
        whole((H, D)), whole((1, D)),                      # W_proj (bf16), b_proj
    ]

    scratch_shapes = [
        pltpu.VMEM((n_heads, T, head_dim), jnp.bfloat16),  # K (head-major)
        pltpu.VMEM((n_heads, T, head_dim), jnp.bfloat16),  # V (head-major)
    ]

    # Scoped-VMEM budget: bf16 weights (double-buffered) + x/out tiles + K/V
    # scratch + f32 intermediates, with headroom; capped below physical VMEM.
    weight_bytes = 2 * (3 * D * D + D * D + 2 * D * H)
    act_bytes = 4 * (T * D + tq * D)
    scratch_bytes = 2 * 2 * T * D                          # bf16 K + V
    inter_bytes = 4 * (2 * n_heads * tq * T + 3 * T * D + tq * (2 * tile_h + 6 * D))
    vmem_limit = int(min(100 * 2**20,
                         max(32 * 2**20,
                             2 * (weight_bytes + act_bytes)
                             + scratch_bytes + inter_bytes + 8 * 2**20)))

    return pl.pallas_call(
        kernel,
        out_shape=jax.ShapeDtypeStruct((B, T, D), x.dtype),
        grid=(B, n_qt),
        in_specs=in_specs,
        out_specs=pl.BlockSpec((1, tq, D), lambda b, qi: (b, qi, 0)),
        scratch_shapes=scratch_shapes,
        compiler_params=pltpu.CompilerParams(
            dimension_semantics=("parallel", "arbitrary"),
            vmem_limit_bytes=vmem_limit),
    )(x,
      params["ln1_g"], params["ln1_s"],
      w_qkv, w_o, params["b_o"],
      params["ln2_g"], params["ln2_s"],
      w_fc, params["b_fc"], w_proj, params["b_proj"])


def init_params(key, emb_dim, n_hidden):
    ks = jax.random.split(key, 8)
    std = 0.02
    p = {
        "ln1_g": jnp.ones((1, emb_dim), jnp.float32),
        "ln1_s": jnp.zeros((1, emb_dim), jnp.float32),
        "ln2_g": jnp.ones((1, emb_dim), jnp.float32),
        "ln2_s": jnp.zeros((1, emb_dim), jnp.float32),
        "w_q": jax.random.normal(ks[0], (emb_dim, emb_dim), jnp.float32) * std,
        "w_k": jax.random.normal(ks[1], (emb_dim, emb_dim), jnp.float32) * std,
        "w_v": jax.random.normal(ks[2], (emb_dim, emb_dim), jnp.float32) * std,
        "w_o": jax.random.normal(ks[3], (emb_dim, emb_dim), jnp.float32) * std,
        "b_o": jnp.zeros((1, emb_dim), jnp.float32),
        "w_fc": jax.random.normal(ks[4], (emb_dim, n_hidden), jnp.float32) * std,
        "b_fc": jnp.zeros((1, n_hidden), jnp.float32),
        "w_proj": jax.random.normal(ks[5], (n_hidden, emb_dim), jnp.float32) * std,
        "b_proj": jnp.zeros((1, emb_dim), jnp.float32),
    }
    return p


if __name__ == "__main__":
    cfg = dict(emb_dim=32, context_length=8, n_heads=4,
               drop_rate=0.0, qkv_bias=False)   # qkv_bias=False -> no q/k/v bias
    B, T, D = 2, cfg["context_length"], cfg["emb_dim"]

    key = jax.random.PRNGKey(0)
    k_x, k_p = jax.random.split(key)
    x = jax.random.normal(k_x, (B, T, D), jnp.float32)
    params = init_params(k_p, D, 4 * D)

    out = transformer_block(x, params, n_heads=cfg["n_heads"])
    jax.block_until_ready(out)
    assert out.shape == (B, T, D) and out.dtype == jnp.float32
    assert bool(jnp.all(jnp.isfinite(out)))
    print("KERNEL_OK")
</pallas_src>

<mosaic_0001>
module attributes {stable_mosaic.version = 11 : i64} {
  func.func @_transformer_block_kernel(%arg0: i32, %arg1: i32, %arg2: memref<1x8x32xf32, #tpu.memory_space<vmem>>, %arg3: memref<1x32xf32, #tpu.memory_space<vmem>>, %arg4: memref<1x32xf32, #tpu.memory_space<vmem>>, %arg5: memref<32x96xbf16, #tpu.memory_space<vmem>>, %arg6: memref<32x32xbf16, #tpu.memory_space<vmem>>, %arg7: memref<1x32xf32, #tpu.memory_space<vmem>>, %arg8: memref<1x32xf32, #tpu.memory_space<vmem>>, %arg9: memref<1x32xf32, #tpu.memory_space<vmem>>, %arg10: memref<32x128xbf16, #tpu.memory_space<vmem>>, %arg11: memref<1x128xf32, #tpu.memory_space<vmem>>, %arg12: memref<128x32xbf16, #tpu.memory_space<vmem>>, %arg13: memref<1x32xf32, #tpu.memory_space<vmem>>, %arg14: memref<1x8x32xf32, #tpu.memory_space<vmem>>, %arg15: memref<4x8x8xbf16, #tpu.memory_space<vmem>>, %arg16: memref<4x8x8xbf16, #tpu.memory_space<vmem>>) attributes {dimension_semantics = [#tpu.dimension_semantics<parallel>, #tpu.dimension_semantics<arbitrary>], iteration_bounds = array<i64: 2, 1>, scalar_prefetch = 0 : i64, scratch_operands = 2 : i64, tpu.core_type = #tpu.core_type<tc>, window_params = [{transform_indices = @transform_0, window_bounds = array<i64: 1, 8, 32>}, {pipeline_mode = #tpu.pipeline_mode<synchronous>, transform_indices = @transform_1, window_bounds = array<i64: 1, 32>}, {pipeline_mode = #tpu.pipeline_mode<synchronous>, transform_indices = @transform_2, window_bounds = array<i64: 1, 32>}, {pipeline_mode = #tpu.pipeline_mode<synchronous>, transform_indices = @transform_3, window_bounds = array<i64: 32, 96>}, {pipeline_mode = #tpu.pipeline_mode<synchronous>, transform_indices = @transform_4, window_bounds = array<i64: 32, 32>}, {pipeline_mode = #tpu.pipeline_mode<synchronous>, transform_indices = @transform_5, window_bounds = array<i64: 1, 32>}, {pipeline_mode = #tpu.pipeline_mode<synchronous>, transform_indices = @transform_6, window_bounds = array<i64: 1, 32>}, {pipeline_mode = #tpu.pipeline_mode<synchronous>, transform_indices = @transform_7, window_bounds = array<i64: 1, 32>}, {pipeline_mode = #tpu.pipeline_mode<synchronous>, transform_indices = @transform_8, window_bounds = array<i64: 32, 128>}, {pipeline_mode = #tpu.pipeline_mode<synchronous>, transform_indices = @transform_9, window_bounds = array<i64: 1, 128>}, {pipeline_mode = #tpu.pipeline_mode<synchronous>, transform_indices = @transform_10, window_bounds = array<i64: 128, 32>}, {pipeline_mode = #tpu.pipeline_mode<synchronous>, transform_indices = @transform_11, window_bounds = array<i64: 1, 32>}, {transform_indices = @transform_12, window_bounds = array<i64: 1, 8, 32>}]} {
    %c8_i32 = arith.constant 8 : i32
    %0 = arith.muli %arg1, %c8_i32 : i32
    %1 = tpu.assume_multiple %0, 8 : i32
    %c0_i32 = arith.constant 0 : i32
    %2 = arith.cmpi eq, %arg1, %c0_i32 : i32
    %3 = arith.extui %2 : i1 to i32
    %c0_i32_0 = arith.constant 0 : i32
    %4 = arith.cmpi ne, %3, %c0_i32_0 : i32
    scf.if %4 {
      %c0_58 = arith.constant 0 : index
      %c0_59 = arith.constant 0 : index
      %c0_60 = arith.constant 0 : index
      %144 = vector.load %arg2[%c0_58, %c0_59, %c0_60] : memref<1x8x32xf32, #tpu.memory_space<vmem>>, vector<1x8x32xf32>
      %145 = vector.shape_cast %144 : vector<1x8x32xf32> to vector<8x32xf32>
      %c0_61 = arith.constant 0 : index
      %c0_62 = arith.constant 0 : index
      %146 = vector.load %arg3[%c0_61, %c0_62] : memref<1x32xf32, #tpu.memory_space<vmem>>, vector<1x32xf32>
      %147 = vector.shape_cast %146 : vector<1x32xf32> to vector<32xf32>
      %c0_63 = arith.constant 0 : index
      %c0_64 = arith.constant 0 : index
      %148 = vector.load %arg4[%c0_63, %c0_64] : memref<1x32xf32, #tpu.memory_space<vmem>>, vector<1x32xf32>
      %149 = vector.shape_cast %148 : vector<1x32xf32> to vector<32xf32>
      %cst_65 = arith.constant dense<0.000000e+00> : vector<8xf32>
      %150 = vector.multi_reduction <add>, %145, %cst_65 [1] : vector<8x32xf32> to vector<8xf32>
      %151 = vector.shape_cast %150 : vector<8xf32> to vector<8x1xf32>
      %cst_66 = arith.constant 3.200000e+01 : f32
      %152 = vector.broadcast %cst_66 : f32 to vector<8x1xf32>
      %153 = arith.divf %151, %152 : vector<8x1xf32>
      %154 = vector.broadcast %153 : vector<8x1xf32> to vector<8x32xf32>
      %155 = arith.subf %145, %154 : vector<8x32xf32>
      %156 = arith.mulf %155, %155 : vector<8x32xf32>
      %cst_67 = arith.constant dense<0.000000e+00> : vector<8xf32>
      %157 = vector.multi_reduction <add>, %156, %cst_67 [1] : vector<8x32xf32> to vector<8xf32>
      %158 = vector.shape_cast %157 : vector<8xf32> to vector<8x1xf32>
      %cst_68 = arith.constant 3.200000e+01 : f32
      %159 = vector.broadcast %cst_68 : f32 to vector<8x1xf32>
      %160 = arith.divf %158, %159 : vector<8x1xf32>
      %161 = vector.broadcast %153 : vector<8x1xf32> to vector<8x32xf32>
      %162 = arith.subf %145, %161 : vector<8x32xf32>
      %cst_69 = arith.constant 9.99999974E-6 : f32
      %163 = vector.broadcast %cst_69 : f32 to vector<8x1xf32>
      %164 = arith.addf %160, %163 : vector<8x1xf32>
      %165 = math.rsqrt %164 : vector<8x1xf32>
      %166 = vector.broadcast %165 : vector<8x1xf32> to vector<8x32xf32>
      %167 = arith.mulf %162, %166 : vector<8x32xf32>
      %168 = vector.shape_cast %147 : vector<32xf32> to vector<1x32xf32>
      %169 = vector.broadcast %168 : vector<1x32xf32> to vector<8x32xf32>
      %170 = arith.mulf %167, %169 : vector<8x32xf32>
      %171 = vector.shape_cast %149 : vector<32xf32> to vector<1x32xf32>
      %172 = vector.broadcast %171 : vector<1x32xf32> to vector<8x32xf32>
      %173 = arith.addf %170, %172 : vector<8x32xf32>
      %174 = arith.truncf %173 : vector<8x32xf32> to vector<8x32xbf16>
      %c0_70 = arith.constant 0 : index
      %c32 = arith.constant 32 : index
      %175 = vector.load %arg5[%c0_70, %c32] : memref<32x96xbf16, #tpu.memory_space<vmem>>, vector<32x64xbf16>
      %cst_71 = arith.constant dense<0.000000e+00> : vector<8x64xf32>
      %176 = tpu.matmul %174, %175, %cst_71 {dimension_numbers = #tpu.dot_dimension_numbers<[1], [0], [0], [1], [0, 0, 1, 1], [], []>} : vector<8x32xbf16>, vector<32x64xbf16>, vector<8x64xf32> -> vector<8x64xf32>
      %177 = vector.extract_strided_slice %176 {offsets = [0, 0], sizes = [8, 32], strides = [1, 1]} : vector<8x64xf32> to vector<8x32xf32>
      %178 = arith.truncf %177 : vector<8x32xf32> to vector<8x32xbf16>
      %179 = vector.shape_cast %178 : vector<8x32xbf16> to vector<8x4x8xbf16>
      %180 = vector.extract_strided_slice %176 {offsets = [0, 32], sizes = [8, 32], strides = [1, 1]} : vector<8x64xf32> to vector<8x32xf32>
      %181 = arith.truncf %180 : vector<8x32xf32> to vector<8x32xbf16>
      %182 = vector.shape_cast %181 : vector<8x32xbf16> to vector<8x4x8xbf16>
      %183 = tpu.transpose %179, [1, 0, 2] : vector<8x4x8xbf16> -> vector<4x8x8xbf16>
      %c0_72 = arith.constant 0 : index
      %c0_73 = arith.constant 0 : index
      %c0_74 = arith.constant 0 : index
      %184 = vector.load %arg15[%c0_72, %c0_73, %c0_74] : memref<4x8x8xbf16, #tpu.memory_space<vmem>>, vector<4x8x8xbf16>
      tpu.vector_store %arg15[%c0_72, %c0_73, %c0_74], %183 {strides = array<i32>} : memref<4x8x8xbf16, #tpu.memory_space<vmem>>, vector<4x8x8xbf16>,
      %185 = tpu.transpose %182, [1, 0, 2] : vector<8x4x8xbf16> -> vector<4x8x8xbf16>
      %c0_75 = arith.constant 0 : index
      %c0_76 = arith.constant 0 : index
      %c0_77 = arith.constant 0 : index
      %186 = vector.load %arg16[%c0_75, %c0_76, %c0_77] : memref<4x8x8xbf16, #tpu.memory_space<vmem>>, vector<4x8x8xbf16>
      tpu.vector_store %arg16[%c0_75, %c0_76, %c0_77], %185 {strides = array<i32>} : memref<4x8x8xbf16, #tpu.memory_space<vmem>>, vector<4x8x8xbf16>,
    } else {
    }
    %c0 = arith.constant 0 : index
    %5 = arith.index_cast %1 : i32 to index
    %c0_1 = arith.constant 0 : index
    %6 = vector.load %arg2[%c0, %5, %c0_1] : memref<1x8x32xf32, #tpu.memory_space<vmem>>, vector<1x8x32xf32>
    %7 = vector.shape_cast %6 : vector<1x8x32xf32> to vector<8x32xf32>
    %c0_2 = arith.constant 0 : index
    %c0_3 = arith.constant 0 : index
    %8 = vector.load %arg3[%c0_2, %c0_3] : memref<1x32xf32, #tpu.memory_space<vmem>>, vector<1x32xf32>
    %9 = vector.shape_cast %8 : vector<1x32xf32> to vector<32xf32>
    %c0_4 = arith.constant 0 : index
    %c0_5 = arith.constant 0 : index
    %10 = vector.load %arg4[%c0_4, %c0_5] : memref<1x32xf32, #tpu.memory_space<vmem>>, vector<1x32xf32>
    %11 = vector.shape_cast %10 : vector<1x32xf32> to vector<32xf32>
    %cst = arith.constant dense<0.000000e+00> : vector<8xf32>
    %12 = vector.multi_reduction <add>, %7, %cst [1] : vector<8x32xf32> to vector<8xf32>
    %13 = vector.shape_cast %12 : vector<8xf32> to vector<8x1xf32>
    %cst_6 = arith.constant 3.200000e+01 : f32
    %14 = vector.broadcast %cst_6 : f32 to vector<8x1xf32>
    %15 = arith.divf %13, %14 : vector<8x1xf32>
    %16 = vector.broadcast %15 : vector<8x1xf32> to vector<8x32xf32>
    %17 = arith.subf %7, %16 : vector<8x32xf32>
    %18 = arith.mulf %17, %17 : vector<8x32xf32>
    %cst_7 = arith.constant dense<0.000000e+00> : vector<8xf32>
    %19 = vector.multi_reduction <add>, %18, %cst_7 [1] : vector<8x32xf32> to vector<8xf32>
    %20 = vector.shape_cast %19 : vector<8xf32> to vector<8x1xf32>
    %cst_8 = arith.constant 3.200000e+01 : f32
    %21 = vector.broadcast %cst_8 : f32 to vector<8x1xf32>
    %22 = arith.divf %20, %21 : vector<8x1xf32>
    %23 = vector.broadcast %15 : vector<8x1xf32> to vector<8x32xf32>
    %24 = arith.subf %7, %23 : vector<8x32xf32>
    %cst_9 = arith.constant 9.99999974E-6 : f32
    %25 = vector.broadcast %cst_9 : f32 to vector<8x1xf32>
    %26 = arith.addf %22, %25 : vector<8x1xf32>
    %27 = math.rsqrt %26 : vector<8x1xf32>
    %28 = vector.broadcast %27 : vector<8x1xf32> to vector<8x32xf32>
    %29 = arith.mulf %24, %28 : vector<8x32xf32>
    %30 = vector.shape_cast %9 : vector<32xf32> to vector<1x32xf32>
    %31 = vector.broadcast %30 : vector<1x32xf32> to vector<8x32xf32>
    %32 = arith.mulf %29, %31 : vector<8x32xf32>
    %33 = vector.shape_cast %11 : vector<32xf32> to vector<1x32xf32>
    %34 = vector.broadcast %33 : vector<1x32xf32> to vector<8x32xf32>
    %35 = arith.addf %32, %34 : vector<8x32xf32>
    %cst_10 = arith.constant 0.353553385 : f32
    %36 = vector.broadcast %cst_10 : f32 to vector<8x32xf32>
    %37 = arith.mulf %35, %36 : vector<8x32xf32>
    %38 = arith.truncf %37 : vector<8x32xf32> to vector<8x32xbf16>
    %c0_11 = arith.constant 0 : index
    %c0_12 = arith.constant 0 : index
    %39 = vector.load %arg5[%c0_11, %c0_12] : memref<32x96xbf16, #tpu.memory_space<vmem>>, vector<32x32xbf16>
    %cst_13 = arith.constant dense<0.000000e+00> : vector<8x32xf32>
    %40 = tpu.matmul %38, %39, %cst_13 {dimension_numbers = #tpu.dot_dimension_numbers<[1], [0], [0], [1], [0, 0, 1, 1], [], []>} : vector<8x32xbf16>, vector<32x32xbf16>, vector<8x32xf32> -> vector<8x32xf32>
    %41 = arith.truncf %40 : vector<8x32xf32> to vector<8x32xbf16>
    %42 = vector.shape_cast %41 : vector<8x32xbf16> to vector<8x4x8xbf16>
    %43 = tpu.transpose %42, [1, 0, 2] : vector<8x4x8xbf16> -> vector<4x8x8xbf16>
    %c0_14 = arith.constant 0 : index
    %c0_15 = arith.constant 0 : index
    %c0_16 = arith.constant 0 : index
    %44 = vector.load %arg15[%c0_14, %c0_15, %c0_16] : memref<4x8x8xbf16, #tpu.memory_space<vmem>>, vector<4x8x8xbf16>
    "tpu.trace_start"() <{level = 10 : i32, message = "hqd,hkd->hqk"}> : () -> ()
    %cst_17 = arith.constant dense<0.000000e+00> : vector<4x8x8xf32>
    %45 = tpu.matmul %43, %44, %cst_17 {dimension_numbers = #tpu.dot_dimension_numbers<[2], [2], [1], [1], [0, 0, 0, 1, 1, 1], [0], [0]>} : vector<4x8x8xbf16>, vector<4x8x8xbf16>, vector<4x8x8xf32> -> vector<4x8x8xf32>
    "tpu.trace_stop"() : () -> ()
    %46 = tpu.iota {dimensions = array<i32: 0>} : vector<8x8xi32>
    %47 = tpu.iota {dimensions = array<i32: 1>} : vector<8x8xi32>
    %48 = vector.broadcast %1 : i32 to vector<8x8xi32>
    %49 = arith.addi %46, %48 : vector<8x8xi32>
    %50 = arith.cmpi sle, %47, %49 : vector<8x8xi32>
    %cst_18 = arith.constant 0.000000e+00 : f32
    %cst_19 = arith.constant -1.000000e+30 : f32
    %51 = vector.broadcast %cst_18 : f32 to vector<8x8xf32>
    %52 = vector.broadcast %cst_19 : f32 to vector<8x8xf32>
    %53 = arith.select %50, %51, %52 : vector<8x8xi1>, vector<8x8xf32>
    %54 = vector.shape_cast %53 : vector<8x8xf32> to vector<1x8x8xf32>
    %55 = vector.broadcast %54 : vector<1x8x8xf32> to vector<4x8x8xf32>
    %56 = arith.addf %45, %55 : vector<4x8x8xf32>
    %cst_20 = arith.constant dense<0xFF800000> : vector<4x8xf32>
    %57 = vector.multi_reduction <maximumf>, %56, %cst_20 [2] : vector<4x8x8xf32> to vector<4x8xf32>
    %58 = vector.shape_cast %57 : vector<4x8xf32> to vector<4x8x1xf32>
    %59 = vector.broadcast %58 : vector<4x8x1xf32> to vector<4x8x8xf32>
    %60 = arith.subf %56, %59 : vector<4x8x8xf32>
    %61 = math.exp %60 : vector<4x8x8xf32>
    %cst_21 = arith.constant dense<0.000000e+00> : vector<4x8xf32>
    %62 = vector.multi_reduction <add>, %61, %cst_21 [2] : vector<4x8x8xf32> to vector<4x8xf32>
    %63 = vector.shape_cast %62 : vector<4x8xf32> to vector<4x8x1xf32>
    %64 = tpu.reciprocal %63 {approx = true} : vector<4x8x1xf32> -> vector<4x8x1xf32>
    %65 = vector.broadcast %64 : vector<4x8x1xf32> to vector<4x8x8xf32>
    %66 = arith.mulf %61, %65 : vector<4x8x8xf32>
    %67 = arith.truncf %66 : vector<4x8x8xf32> to vector<4x8x8xbf16>
    %c0_22 = arith.constant 0 : index
    %c0_23 = arith.constant 0 : index
    %c0_24 = arith.constant 0 : index
    %68 = vector.load %arg16[%c0_22, %c0_23, %c0_24] : memref<4x8x8xbf16, #tpu.memory_space<vmem>>, vector<4x8x8xbf16>
    "tpu.trace_start"() <{level = 10 : i32, message = "hqk,hkd->hqd"}> : () -> ()
    %cst_25 = arith.constant dense<0.000000e+00> : vector<4x8x8xf32>
    %69 = tpu.matmul %67, %68, %cst_25 {dimension_numbers = #tpu.dot_dimension_numbers<[2], [1], [1], [2], [0, 0, 0, 1, 1, 2], [0], [0]>} : vector<4x8x8xbf16>, vector<4x8x8xbf16>, vector<4x8x8xf32> -> vector<4x8x8xf32>
    "tpu.trace_stop"() : () -> ()
    %70 = tpu.transpose %69, [1, 0, 2] : vector<4x8x8xf32> -> vector<8x4x8xf32>
    %71 = vector.shape_cast %70 : vector<8x4x8xf32> to vector<8x32xf32>
    %72 = arith.truncf %71 : vector<8x32xf32> to vector<8x32xbf16>
    %c0_26 = arith.constant 0 : index
    %c0_27 = arith.constant 0 : index
    %73 = vector.load %arg6[%c0_26, %c0_27] : memref<32x32xbf16, #tpu.memory_space<vmem>>, vector<32x32xbf16>
    %cst_28 = arith.constant dense<0.000000e+00> : vector<8x32xf32>
    %74 = tpu.matmul %72, %73, %cst_28 {dimension_numbers = #tpu.dot_dimension_numbers<[1], [0], [0], [1], [0, 0, 1, 1], [], []>} : vector<8x32xbf16>, vector<32x32xbf16>, vector<8x32xf32> -> vector<8x32xf32>
    %c0_29 = arith.constant 0 : index
    %c0_30 = arith.constant 0 : index
    %75 = vector.load %arg7[%c0_29, %c0_30] : memref<1x32xf32, #tpu.memory_space<vmem>>, vector<1x32xf32>
    %76 = vector.shape_cast %75 : vector<1x32xf32> to vector<32xf32>
    %77 = vector.shape_cast %76 : vector<32xf32> to vector<1x32xf32>
    %78 = vector.broadcast %77 : vector<1x32xf32> to vector<8x32xf32>
    %79 = arith.addf %74, %78 : vector<8x32xf32>
    %80 = arith.addf %7, %79 : vector<8x32xf32>
    %c0_31 = arith.constant 0 : index
    %c0_32 = arith.constant 0 : index
    %81 = vector.load %arg8[%c0_31, %c0_32] : memref<1x32xf32, #tpu.memory_space<vmem>>, vector<1x32xf32>
    %82 = vector.shape_cast %81 : vector<1x32xf32> to vector<32xf32>
    %c0_33 = arith.constant 0 : index
    %c0_34 = arith.constant 0 : index
    %83 = vector.load %arg9[%c0_33, %c0_34] : memref<1x32xf32, #tpu.memory_space<vmem>>, vector<1x32xf32>
    %84 = vector.shape_cast %83 : vector<1x32xf32> to vector<32xf32>
    %cst_35 = arith.constant dense<0.000000e+00> : vector<8xf32>
    %85 = vector.multi_reduction <add>, %80, %cst_35 [1] : vector<8x32xf32> to vector<8xf32>
    %86 = vector.shape_cast %85 : vector<8xf32> to vector<8x1xf32>
    %cst_36 = arith.constant 3.200000e+01 : f32
    %87 = vector.broadcast %cst_36 : f32 to vector<8x1xf32>
    %88 = arith.divf %86, %87 : vector<8x1xf32>
    %89 = vector.broadcast %88 : vector<8x1xf32> to vector<8x32xf32>
    %90 = arith.subf %80, %89 : vector<8x32xf32>
    %91 = arith.mulf %90, %90 : vector<8x32xf32>
    %cst_37 = arith.constant dense<0.000000e+00> : vector<8xf32>
    %92 = vector.multi_reduction <add>, %91, %cst_37 [1] : vector<8x32xf32> to vector<8xf32>
    %93 = vector.shape_cast %92 : vector<8xf32> to vector<8x1xf32>
    %cst_38 = arith.constant 3.200000e+01 : f32
    %94 = vector.broadcast %cst_38 : f32 to vector<8x1xf32>
    %95 = arith.divf %93, %94 : vector<8x1xf32>
    %96 = vector.broadcast %88 : vector<8x1xf32> to vector<8x32xf32>
    %97 = arith.subf %80, %96 : vector<8x32xf32>
    %cst_39 = arith.constant 9.99999974E-6 : f32
    %98 = vector.broadcast %cst_39 : f32 to vector<8x1xf32>
    %99 = arith.addf %95, %98 : vector<8x1xf32>
    %100 = math.rsqrt %99 : vector<8x1xf32>
    %101 = vector.broadcast %100 : vector<8x1xf32> to vector<8x32xf32>
    %102 = arith.mulf %97, %101 : vector<8x32xf32>
    %103 = vector.shape_cast %82 : vector<32xf32> to vector<1x32xf32>
    %104 = vector.broadcast %103 : vector<1x32xf32> to vector<8x32xf32>
    %105 = arith.mulf %102, %104 : vector<8x32xf32>
    %106 = vector.shape_cast %84 : vector<32xf32> to vector<1x32xf32>
    %107 = vector.broadcast %106 : vector<1x32xf32> to vector<8x32xf32>
    %108 = arith.addf %105, %107 : vector<8x32xf32>
    %109 = arith.truncf %108 : vector<8x32xf32> to vector<8x32xbf16>
    %cst_40 = arith.constant 0.000000e+00 : f32
    %110 = vector.broadcast %cst_40 : f32 to vector<8x32xf32>
    %c0_41 = arith.constant 0 : index
    %c0_42 = arith.constant 0 : index
    %111 = vector.load %arg10[%c0_41, %c0_42] : memref<32x128xbf16, #tpu.memory_space<vmem>>, vector<32x128xbf16>
    %cst_43 = arith.constant dense<0.000000e+00> : vector<8x128xf32>
    %112 = tpu.matmul %109, %111, %cst_43 {dimension_numbers = #tpu.dot_dimension_numbers<[1], [0], [0], [1], [0, 0, 1, 1], [], []>} : vector<8x32xbf16>, vector<32x128xbf16>, vector<8x128xf32> -> vector<8x128xf32>
    %c0_44 = arith.constant 0 : index
    %c0_45 = arith.constant 0 : index
    %113 = vector.load %arg11[%c0_44, %c0_45] : memref<1x128xf32, #tpu.memory_space<vmem>>, vector<1x128xf32>
    %114 = vector.shape_cast %113 : vector<1x128xf32> to vector<128xf32>
    %115 = vector.shape_cast %114 : vector<128xf32> to vector<1x128xf32>
    %116 = vector.broadcast %115 : vector<1x128xf32> to vector<8x128xf32>
    %117 = arith.addf %112, %116 : vector<8x128xf32>
    %cst_46 = arith.constant 5.000000e-01 : f32
    %118 = vector.broadcast %cst_46 : f32 to vector<8x128xf32>
    %119 = arith.mulf %118, %117 : vector<8x128xf32>
    %120 = arith.mulf %117, %117 : vector<8x128xf32>
    %121 = arith.mulf %117, %120 : vector<8x128xf32>
    %cst_47 = arith.constant 4.471500e-02 : f32
    %122 = vector.broadcast %cst_47 : f32 to vector<8x128xf32>
    %123 = arith.mulf %122, %121 : vector<8x128xf32>
    %124 = arith.addf %117, %123 : vector<8x128xf32>
    %cst_48 = arith.constant 0.797884583 : f32
    %125 = vector.broadcast %cst_48 : f32 to vector<8x128xf32>
    %126 = arith.mulf %125, %124 : vector<8x128xf32>
    %127 = math.tanh %126 : vector<8x128xf32>
    %cst_49 = arith.constant 1.000000e+00 : f32
    %128 = vector.broadcast %cst_49 : f32 to vector<8x128xf32>
    %129 = arith.addf %128, %127 : vector<8x128xf32>
    %130 = arith.mulf %119, %129 : vector<8x128xf32>
    %131 = arith.truncf %130 : vector<8x128xf32> to vector<8x128xbf16>
    %c0_50 = arith.constant 0 : index
    %c0_51 = arith.constant 0 : index
    %132 = vector.load %arg12[%c0_50, %c0_51] : memref<128x32xbf16, #tpu.memory_space<vmem>>, vector<128x32xbf16>
    %cst_52 = arith.constant dense<0.000000e+00> : vector<8x32xf32>
    %133 = tpu.matmul %131, %132, %cst_52 {dimension_numbers = #tpu.dot_dimension_numbers<[1], [0], [0], [1], [0, 0, 1, 1], [], []>} : vector<8x128xbf16>, vector<128x32xbf16>, vector<8x32xf32> -> vector<8x32xf32>
    %134 = arith.addf %110, %133 : vector<8x32xf32>
    %c0_53 = arith.constant 0 : index
    %c0_54 = arith.constant 0 : index
    %135 = vector.load %arg13[%c0_53, %c0_54] : memref<1x32xf32, #tpu.memory_space<vmem>>, vector<1x32xf32>
    %136 = vector.shape_cast %135 : vector<1x32xf32> to vector<32xf32>
    %137 = vector.shape_cast %136 : vector<32xf32> to vector<1x32xf32>
    %138 = vector.broadcast %137 : vector<1x32xf32> to vector<8x32xf32>
    %139 = arith.addf %134, %138 : vector<8x32xf32>
    %140 = arith.addf %80, %139 : vector<8x32xf32>
    %c0_55 = arith.constant 0 : index
    %c0_56 = arith.constant 0 : index
    %c0_57 = arith.constant 0 : index
    %141 = vector.load %arg14[%c0_55, %c0_56, %c0_57] : memref<1x8x32xf32, #tpu.memory_space<vmem>>, vector<1x8x32xf32>
    %142 = vector.shape_cast %141 : vector<1x8x32xf32> to vector<8x32xf32>
    %143 = vector.shape_cast %140 : vector<8x32xf32> to vector<1x8x32xf32>
    tpu.vector_store %arg14[%c0_55, %c0_56, %c0_57], %143 {strides = array<i32>} : memref<1x8x32xf32, #tpu.memory_space<vmem>>, vector<1x8x32xf32>,
    return
  }
  func.func @transform_0(%arg0: i32, %arg1: i32) -> (i32, i32, i32) {
    %c0_i32 = arith.constant 0 : i32
    %c0_i32_0 = arith.constant 0 : i32
    %c0_i32_1 = arith.constant 0 : i32
    return %arg0, %c0_i32, %c0_i32_0 : i32, i32, i32
  }
  func.func @transform_1(%arg0: i32, %arg1: i32) -> (i32, i32) {
    %c0_i32 = arith.constant 0 : i32
    %c0_i32_0 = arith.constant 0 : i32
    %c0_i32_1 = arith.constant 0 : i32
    return %c0_i32, %c0_i32_0 : i32, i32
  }
  func.func @transform_2(%arg0: i32, %arg1: i32) -> (i32, i32) {
    %c0_i32 = arith.constant 0 : i32
    %c0_i32_0 = arith.constant 0 : i32
    %c0_i32_1 = arith.constant 0 : i32
    return %c0_i32, %c0_i32_0 : i32, i32
  }
  func.func @transform_3(%arg0: i32, %arg1: i32) -> (i32, i32) {
    %c0_i32 = arith.constant 0 : i32
    %c0_i32_0 = arith.constant 0 : i32
    %c0_i32_1 = arith.constant 0 : i32
    return %c0_i32, %c0_i32_0 : i32, i32
  }
  func.func @transform_4(%arg0: i32, %arg1: i32) -> (i32, i32) {
    %c0_i32 = arith.constant 0 : i32
    %c0_i32_0 = arith.constant 0 : i32
    %c0_i32_1 = arith.constant 0 : i32
    return %c0_i32, %c0_i32_0 : i32, i32
  }
  func.func @transform_5(%arg0: i32, %arg1: i32) -> (i32, i32) {
    %c0_i32 = arith.constant 0 : i32
    %c0_i32_0 = arith.constant 0 : i32
    %c0_i32_1 = arith.constant 0 : i32
    return %c0_i32, %c0_i32_0 : i32, i32
  }
  func.func @transform_6(%arg0: i32, %arg1: i32) -> (i32, i32) {
    %c0_i32 = arith.constant 0 : i32
    %c0_i32_0 = arith.constant 0 : i32
    %c0_i32_1 = arith.constant 0 : i32
    return %c0_i32, %c0_i32_0 : i32, i32
  }
  func.func @transform_7(%arg0: i32, %arg1: i32) -> (i32, i32) {
    %c0_i32 = arith.constant 0 : i32
    %c0_i32_0 = arith.constant 0 : i32
    %c0_i32_1 = arith.constant 0 : i32
    return %c0_i32, %c0_i32_0 : i32, i32
  }
  func.func @transform_8(%arg0: i32, %arg1: i32) -> (i32, i32) {
    %c0_i32 = arith.constant 0 : i32
    %c0_i32_0 = arith.constant 0 : i32
    %c0_i32_1 = arith.constant 0 : i32
    return %c0_i32, %c0_i32_0 : i32, i32
  }
  func.func @transform_9(%arg0: i32, %arg1: i32) -> (i32, i32) {
    %c0_i32 = arith.constant 0 : i32
    %c0_i32_0 = arith.constant 0 : i32
    %c0_i32_1 = arith.constant 0 : i32
    return %c0_i32, %c0_i32_0 : i32, i32
  }
  func.func @transform_10(%arg0: i32, %arg1: i32) -> (i32, i32) {
    %c0_i32 = arith.constant 0 : i32
    %c0_i32_0 = arith.constant 0 : i32
    %c0_i32_1 = arith.constant 0 : i32
    return %c0_i32, %c0_i32_0 : i32, i32
  }
  func.func @transform_11(%arg0: i32, %arg1: i32) -> (i32, i32) {
    %c0_i32 = arith.constant 0 : i32
    %c0_i32_0 = arith.constant 0 : i32
    %c0_i32_1 = arith.constant 0 : i32
    return %c0_i32, %c0_i32_0 : i32, i32
  }
  func.func @transform_12(%arg0: i32, %arg1: i32) -> (i32, i32, i32) {
    %c0_i32 = arith.constant 0 : i32
    %c0_i32_0 = arith.constant 0 : i32
    return %arg0, %arg1, %c0_i32 : i32, i32, i32
  }
}

</mosaic_0001>

<llo_original>
// kernel: tpu_custom_call.1
$region0: #{tpu_custom_call.1}
  #allocation0 [shape = 'u32[]', space=smem, size = 0x4, offset = 0x4, fixed_abs, tag = 'smem constant byte address 0x4 - core index']
  #allocation1 [shape = 'u32[72,128]{1,0:T(1,128)}', space=vmem, size = 0x9000, scoped, tag = 'internal scratch']
  #allocation2 [shape = 'bf16[4,8,8]{2,1,0:T(8,128)(2,1)}', space=vmem, size = 0x2000, scoped, tag = 'scratch operand']
  #allocation3 [shape = 'bf16[4,8,8]{2,1,0:T(8,128)(2,1)}', space=vmem, size = 0x2000, scoped, tag = 'scratch operand']
  %s0 = inlined_call_operand.vmem [shape: f32[2,8,32], index: 0, kind: input, shape index: {}]
  %s1 = inlined_call_operand.vmem [shape: f32[1,32], index: 1, kind: input, shape index: {}]
  %s2 = inlined_call_operand.vmem [shape: f32[1,32], index: 2, kind: input, shape index: {}]
  %s3 = inlined_call_operand.vmem [shape: bf16[32,96], index: 3, kind: input, shape index: {}]
  %s4 = inlined_call_operand.vmem [shape: bf16[32,32], index: 4, kind: input, shape index: {}]
  %s5 = inlined_call_operand.vmem [shape: f32[1,32], index: 5, kind: input, shape index: {}]
  %s6 = inlined_call_operand.vmem [shape: f32[1,32], index: 6, kind: input, shape index: {}]
  %s7 = inlined_call_operand.vmem [shape: f32[1,32], index: 7, kind: input, shape index: {}]
  %s8 = inlined_call_operand.vmem [shape: bf16[32,128], index: 8, kind: input, shape index: {}]
  %s9 = inlined_call_operand.vmem [shape: f32[1,128], index: 9, kind: input, shape index: {}]
  %s10 = inlined_call_operand.vmem [shape: bf16[128,32], index: 10, kind: input, shape index: {}]
  %s11 = inlined_call_operand.vmem [shape: f32[1,32], index: 11, kind: input, shape index: {}]
  %s12 = inlined_call_operand.hbm [shape: f32[2,8,32], index: 12, kind: output, shape index: {}]
  %s13 = sld [smem:[#allocation0]]
  $region85: #{tpu_custom_call.1} parent=0
    _
  %s15 = ssub.s32 1, %s13
  %s16 = scalar_select 0, %s15, %s13
  $region1: #{tpu_custom_call.1} parent=0
    #allocation4 [shape = 'u8[8192]{0}', space=vmem, size = 0x2000, scoped, tag = 'output window, operand 0']
    #allocation5 [shape = 's32[2]{0}', space=sflag, size = 0x8, scoped, tag = 'scoped memory for tpu_custom_call.1']
    %17 = vsyncpa [#allocation5], 0
    %s18 = scalar_lea.sflag [#allocation5], 1
    %19 = vsyncpa %s18, 0
    loop: start=0, step=1, limit=4
    $region2: #{tpu_custom_call.1} parent=1 // loop_pre_header
      _
    $region3: #{tpu_custom_call.1} parent=1 // loop_header
      %s21 = sphi 0, %s25
      %p22 = scmp.ge.s32.totalorder %s21, 4
      %s28 = sphi 0, %s40
      %s29 = sphi 0, %s36
      %s30 = sphi 0, %s28
      %s31 = sphi 0, %s29
      %s32 = sphi 0, %s30
      %s33 = sphi 0, %s31
      %s43 = sphi 0, %s45
      %s46 = sphi 0, %s43
      %s47 = sphi 0, %s46
      %s63 = sphi 0, %s47
      %s67 = sphi 0, %s67
      %s69 = sphi 0, %s67
      %s70 = sphi 0, %s69
      %s84 = sphi 0, %s70
      %s88 = sphi 0, %s88
      %s90 = sphi 0, %s88
      %s91 = sphi 0, %s90
      %s105 = sphi 0, %s91
      %s109 = sphi 0, %s109
      %s111 = sphi 0, %s109
      %s112 = sphi 0, %s111
      %s126 = sphi 0, %s112
      %s130 = sphi 0, %s130
      %s132 = sphi 0, %s130
      %s133 = sphi 0, %s132
      %s147 = sphi 0, %s133
      %s151 = sphi 0, %s151
      %s153 = sphi 0, %s151
      %s154 = sphi 0, %s153
      %s168 = sphi 0, %s154
      %s172 = sphi 0, %s172
      %s174 = sphi 0, %s172
      %s175 = sphi 0, %s174
      %s189 = sphi 0, %s175
      %s193 = sphi 0, %s193
      %s195 = sphi 0, %s193
      %s196 = sphi 0, %s195
      %s210 = sphi 0, %s196
      %s214 = sphi 0, %s214
      %s216 = sphi 0, %s214
      %s217 = sphi 0, %s216
      %s231 = sphi 0, %s217
      %s235 = sphi 0, %s235
      %s237 = sphi 0, %s235
      %s238 = sphi 0, %s237
      %s252 = sphi 0, %s238
      %s256 = sphi 0, %s256
      %s258 = sphi 0, %s256
      %s259 = sphi 0, %s258
      %s273 = sphi 0, %s259
      %s277 = sphi 0, %s277
      %s279 = sphi 0, %s277
      %s280 = sphi 0, %s279
      %s294 = sphi 0, %s280
      %s302 = sphi 0, %s304
      %s305 = sphi 0, %s302
      %s306 = sphi 0, %s305
      %s322 = sphi 0, %s306
    $region4: #{tpu_custom_call.1} parent=1 // loop_header_branch
      %24 = sbr.rel (%p22) target = $region8
    $region5: #{tpu_custom_call.1} parent=1 // loop_body
      %s26 = ssub.s32 %s21, 1
      %s27 = ssub.s32 %s21, 2
      %s34 = sadd.s32 1, %s29
      %p35 = scmp.ge.s32.totalorder %s34, 1
      %s36 = scalar_select %p35, 0, %s34
      %s37 = sadd.s32 1, %s28
      %s38 = scalar_select %p35, %s37, %s28
      %p39 = scmp.ge.s32.totalorder %s38, 2
      %s40 = scalar_select %p39, 0, %s38
      %s41 = ssub.s32 %s28, %s40
      %p42 = scmp.eq.s32.totalorder %s41, 0
      %s44 = sadd.s32 %s43, 1
      %s45 = scalar_select %p42, %s43, %s44
      %p48 = pneg %p42
      %p49 = scmp.eq.s32.totalorder %s21, 1
      %p50 = por %p48, %p49
      %p51 = scmp.ne.s32.totalorder %s43, %s46
      %p52 = scmp.eq.s32.totalorder %s21, 0
      %p53 = por %p51, %p52
      %p54 = scmp.ne.s32.totalorder %s43, %s46
      %p55 = scmp.eq.s32.totalorder %s26, 1
      %p56 = por %p54, %p55
      %p57 = scmp.ne.s32.totalorder %s46, %s47
      %p58 = scmp.eq.s32.totalorder %s26, 0
      %p59 = por %p57, %p58
      %p60 = scmp.ne.s32.totalorder %s46, %s47
      %p61 = scmp.eq.s32.totalorder %s27, 1
      %p62 = por %p60, %p61
      %p64 = scmp.ne.s32.totalorder %s47, %s63
      %p65 = scmp.eq.s32.totalorder %s27, 0
      %p66 = por %p64, %p65
      %s68 = sadd.s32 %s67, 1
      %p71 = scmp.eq.s32.totalorder %s21, 1
      %p72 = scmp.ne.s32.totalorder %s67, %s69
      %p73 = scmp.eq.s32.totalorder %s21, 0
      %p74 = por %p72, %p73
      %p75 = scmp.ne.s32.totalorder %s67, %s69
      %p76 = scmp.eq.s32.totalorder %s26, 1
      %p77 = por %p75, %p76
      %p78 = scmp.ne.s32.totalorder %s69, %s70
      %p79 = scmp.eq.s32.totalorder %s26, 0
      %p80 = por %p78, %p79
      %p81 = scmp.ne.s32.totalorder %s69, %s70
      %p82 = scmp.eq.s32.totalorder %s27, 1
      %p83 = por %p81, %p82
      %p85 = scmp.ne.s32.totalorder %s70, %s84
      %p86 = scmp.eq.s32.totalorder %s27, 0
      %p87 = por %p85, %p86
      %s89 = sadd.s32 %s88, 1
      %p92 = scmp.eq.s32.totalorder %s21, 1
      %p93 = scmp.ne.s32.totalorder %s88, %s90
      %p94 = scmp.eq.s32.totalorder %s21, 0
      %p95 = por %p93, %p94
      %p96 = scmp.ne.s32.totalorder %s88, %s90
      %p97 = scmp.eq.s32.totalorder %s26, 1
      %p98 = por %p96, %p97
      %p99 = scmp.ne.s32.totalorder %s90, %s91
      %p100 = scmp.eq.s32.totalorder %s26, 0
      %p101 = por %p99, %p100
      %p102 = scmp.ne.s32.totalorder %s90, %s91
      %p103 = scmp.eq.s32.totalorder %s27, 1
      %p104 = por %p102, %p103
      %p106 = scmp.ne.s32.totalorder %s91, %s105
      %p107 = scmp.eq.s32.totalorder %s27, 0
      %p108 = por %p106, %p107
      %s110 = sadd.s32 %s109, 1
      %p113 = scmp.eq.s32.totalorder %s21, 1
      %p114 = scmp.ne.s32.totalorder %s109, %s111
      %p115 = scmp.eq.s32.totalorder %s21, 0
      %p116 = por %p114, %p115
      %p117 = scmp.ne.s32.totalorder %s109, %s111
      %p118 = scmp.eq.s32.totalorder %s26, 1
      %p119 = por %p117, %p118
      %p120 = scmp.ne.s32.totalorder %s111, %s112
      %p121 = scmp.eq.s32.totalorder %s26, 0
      %p122 = por %p120, %p121
      %p123 = scmp.ne.s32.totalorder %s111, %s112
      %p124 = scmp.eq.s32.totalorder %s27, 1
      %p125 = por %p123, %p124
      %p127 = scmp.ne.s32.totalorder %s112, %s126
      %p128 = scmp.eq.s32.totalorder %s27, 0
      %p129 = por %p127, %p128
      %s131 = sadd.s32 %s130, 1
      %p134 = scmp.eq.s32.totalorder %s21, 1
      %p135 = scmp.ne.s32.totalorder %s130, %s132
      %p136 = scmp.eq.s32.totalorder %s21, 0
      %p137 = por %p135, %p136
      %p138 = scmp.ne.s32.totalorder %s130, %s132
      %p139 = scmp.eq.s32.totalorder %s26, 1
      %p140 = por %p138, %p139
      %p141 = scmp.ne.s32.totalorder %s132, %s133
      %p142 = scmp.eq.s32.totalorder %s26, 0
      %p143 = por %p141, %p142
      %p144 = scmp.ne.s32.totalorder %s132, %s133
      %p145 = scmp.eq.s32.totalorder %s27, 1
      %p146 = por %p144, %p145
      %p148 = scmp.ne.s32.totalorder %s133, %s147
      %p149 = scmp.eq.s32.totalorder %s27, 0
      %p150 = por %p148, %p149
      %s152 = sadd.s32 %s151, 1
      %p155 = scmp.eq.s32.totalorder %s21, 1
      %p156 = scmp.ne.s32.totalorder %s151, %s153
      %p157 = scmp.eq.s32.totalorder %s21, 0
      %p158 = por %p156, %p157
      %p159 = scmp.ne.s32.totalorder %s151, %s153
      %p160 = scmp.eq.s32.totalorder %s26, 1
      %p161 = por %p159, %p160
      %p162 = scmp.ne.s32.totalorder %s153, %s154
      %p163 = scmp.eq.s32.totalorder %s26, 0
      %p164 = por %p162, %p163
      %p165 = scmp.ne.s32.totalorder %s153, %s154
      %p166 = scmp.eq.s32.totalorder %s27, 1
      %p167 = por %p165, %p166
      %p169 = scmp.ne.s32.totalorder %s154, %s168
      %p170 = scmp.eq.s32.totalorder %s27, 0
      %p171 = por %p169, %p170
      %s173 = sadd.s32 %s172, 1
      %p176 = scmp.eq.s32.totalorder %s21, 1
      %p177 = scmp.ne.s32.totalorder %s172, %s174
      %p178 = scmp.eq.s32.totalorder %s21, 0
      %p179 = por %p177, %p178
      %p180 = scmp.ne.s32.totalorder %s172, %s174
      %p181 = scmp.eq.s32.totalorder %s26, 1
      %p182 = por %p180, %p181
      %p183 = scmp.ne.s32.totalorder %s174, %s175
      %p184 = scmp.eq.s32.totalorder %s26, 0
      %p185 = por %p183, %p184
      %p186 = scmp.ne.s32.totalorder %s174, %s175
      %p187 = scmp.eq.s32.totalorder %s27, 1
      %p188 = por %p186, %p187
      %p190 = scmp.ne.s32.totalorder %s175, %s189
      %p191 = scmp.eq.s32.totalorder %s27, 0
      %p192 = por %p190, %p191
      %s194 = sadd.s32 %s193, 1
      %p197 = scmp.eq.s32.totalorder %s21, 1
      %p198 = scmp.ne.s32.totalorder %s193, %s195
      %p199 = scmp.eq.s32.totalorder %s21, 0
      %p200 = por %p198, %p199
      %p201 = scmp.ne.s32.totalorder %s193, %s195
      %p202 = scmp.eq.s32.totalorder %s26, 1
      %p203 = por %p201, %p202
      %p204 = scmp.ne.s32.totalorder %s195, %s196
      %p205 = scmp.eq.s32.totalorder %s26, 0
      %p206 = por %p204, %p205
      %p207 = scmp.ne.s32.totalorder %s195, %s196
      %p208 = scmp.eq.s32.totalorder %s27, 1
      %p209 = por %p207, %p208
      %p211 = scmp.ne.s32.totalorder %s196, %s210
      %p212 = scmp.eq.s32.totalorder %s27, 0
      %p213 = por %p211, %p212
      %s215 = sadd.s32 %s214, 1
      %p218 = scmp.eq.s32.totalorder %s21, 1
      %p219 = scmp.ne.s32.totalorder %s214, %s216
      %p220 = scmp.eq.s32.totalorder %s21, 0
      %p221 = por %p219, %p220
      %p222 = scmp.ne.s32.totalorder %s214, %s216
      %p223 = scmp.eq.s32.totalorder %s26, 1
      %p224 = por %p222, %p223
      %p225 = scmp.ne.s32.totalorder %s216, %s217
      %p226 = scmp.eq.s32.totalorder %s26, 0
      %p227 = por %p225, %p226
      %p228 = scmp.ne.s32.totalorder %s216, %s217
      %p229 = scmp.eq.s32.totalorder %s27, 1
      %p230 = por %p228, %p229
      %p232 = scmp.ne.s32.totalorder %s217, %s231
      %p233 = scmp.eq.s32.totalorder %s27, 0
      %p234 = por %p232, %p233
      %s236 = sadd.s32 %s235, 1
      %p239 = scmp.eq.s32.totalorder %s21, 1
      %p240 = scmp.ne.s32.totalorder %s235, %s237
      %p241 = scmp.eq.s32.totalorder %s21, 0
      %p242 = por %p240, %p241
      %p243 = scmp.ne.s32.totalorder %s235, %s237
      %p244 = scmp.eq.s32.totalorder %s26, 1
      %p245 = por %p243, %p244
      %p246 = scmp.ne.s32.totalorder %s237, %s238
      %p247 = scmp.eq.s32.totalorder %s26, 0
      %p248 = por %p246, %p247
      %p249 = scmp.ne.s32.totalorder %s237, %s238
      %p250 = scmp.eq.s32.totalorder %s27, 1
      %p251 = por %p249, %p250
      %p253 = scmp.ne.s32.totalorder %s238, %s252
      %p254 = scmp.eq.s32.totalorder %s27, 0
      %p255 = por %p253, %p254
      %s257 = sadd.s32 %s256, 1
      %p260 = scmp.eq.s32.totalorder %s21, 1
      %p261 = scmp.ne.s32.totalorder %s256, %s258
      %p262 = scmp.eq.s32.totalorder %s21, 0
      %p263 = por %p261, %p262
      %p264 = scmp.ne.s32.totalorder %s256, %s258
      %p265 = scmp.eq.s32.totalorder %s26, 1
      %p266 = por %p264, %p265
      %p267 = scmp.ne.s32.totalorder %s258, %s259
      %p268 = scmp.eq.s32.totalorder %s26, 0
      %p269 = por %p267, %p268
      %p270 = scmp.ne.s32.totalorder %s258, %s259
      %p271 = scmp.eq.s32.totalorder %s27, 1
      %p272 = por %p270, %p271
      %p274 = scmp.ne.s32.totalorder %s259, %s273
      %p275 = scmp.eq.s32.totalorder %s27, 0
      %p276 = por %p274, %p275
      %s278 = sadd.s32 %s277, 1
      %p281 = scmp.eq.s32.totalorder %s21, 1
      %p282 = scmp.ne.s32.totalorder %s277, %s279
      %p283 = scmp.eq.s32.totalorder %s21, 0
      %p284 = por %p282, %p283
      %p285 = scmp.ne.s32.totalorder %s277, %s279
      %p286 = scmp.eq.s32.totalorder %s26, 1
      %p287 = por %p285, %p286
      %p288 = scmp.ne.s32.totalorder %s279, %s280
      %p289 = scmp.eq.s32.totalorder %s26, 0
      %p290 = por %p288, %p289
      %p291 = scmp.ne.s32.totalorder %s279, %s280
      %p292 = scmp.eq.s32.totalorder %s27, 1
      %p293 = por %p291, %p292
      %p295 = scmp.ne.s32.totalorder %s280, %s294
      %p296 = scmp.eq.s32.totalorder %s27, 0
      %p297 = por %p295, %p296
      %s298 = ssub.s32 %s28, %s40
      %s299 = ssub.s32 %s29, %s36
      %s300 = sor.u32 %s298, %s299
      %p301 = scmp.eq.s32.totalorder %s300, 0
      %s303 = sadd.s32 %s302, 1
      %s304 = scalar_select %p301, %s302, %s303
      %p307 = pneg %p301
      %p308 = scmp.eq.s32.totalorder %s21, 1
      %p309 = por %p307, %p308
      %p310 = scmp.ne.s32.totalorder %s302, %s305
      %p311 = scmp.eq.s32.totalorder %s21, 0
      %p312 = por %p310, %p311
      %p313 = scmp.ne.s32.totalorder %s302, %s305
      %p314 = scmp.eq.s32.totalorder %s26, 1
      %p315 = por %p313, %p314
      %p316 = scmp.ne.s32.totalorder %s305, %s306
      %p317 = scmp.eq.s32.totalorder %s26, 0
      %p318 = por %p316, %p317
      %p319 = scmp.ne.s32.totalorder %s305, %s306
      %p320 = scmp.eq.s32.totalorder %s27, 1
      %p321 = por %p319, %p320
      %p323 = scmp.ne.s32.totalorder %s306, %s322
      %p324 = scmp.eq.s32.totalorder %s27, 0
      %p325 = por %p323, %p324
      %p326 = scmp.le.s32.totalorder 1, %s21
      %p327 = scmp.lt.s32.totalorder %s21, 3
      %p328 = pnand %p326, %p327
      %p329 = pneg %p328
      // Predicated region
      $region9: #{tpu_custom_call.1} parent=5 // pred_check
        _
      $region10: #{tpu_custom_call.1} parent=5 // pred_check_branch
        %331 = sbr.rel (%p328) target = $region12
      $region11: #{tpu_custom_call.1} parent=5 // pred_region
        %s332 = ssub.s32 %s21, 1
        // Predicated region
        $region13: #{tpu_custom_call.1} parent=11 // pred_check
          %p333 = pneg %p80
        $region14: #{tpu_custom_call.1} parent=11 // pred_check_branch
          %335 = sbr.rel (%p333) target = $region16
        $region15: #{tpu_custom_call.1} parent=11 // pred_region
          _
        $region16: #{tpu_custom_call.1} parent=11 // pred_fallthru
          _
        // Predicated region
        $region17: #{tpu_custom_call.1} parent=11 // pred_check
          %p336 = pneg %p101
        $region18: #{tpu_custom_call.1} parent=11 // pred_check_branch
          %338 = sbr.rel (%p336) target = $region20
        $region19: #{tpu_custom_call.1} parent=11 // pred_region
          _
        $region20: #{tpu_custom_call.1} parent=11 // pred_fallthru
          _
        // Predicated region
        $region21: #{tpu_custom_call.1} parent=11 // pred_check
          %p339 = pneg %p122
        $region22: #{tpu_custom_call.1} parent=11 // pred_check_branch
          %341 = sbr.rel (%p339) target = $region24
        $region23: #{tpu_custom_call.1} parent=11 // pred_region
          _
        $region24: #{tpu_custom_call.1} parent=11 // pred_fallthru
          _
        // Predicated region
        $region25: #{tpu_custom_call.1} parent=11 // pred_check
          %p342 = pneg %p143
        $region26: #{tpu_custom_call.1} parent=11 // pred_check_branch
          %344 = sbr.rel (%p342) target = $region28
        $region27: #{tpu_custom_call.1} parent=11 // pred_region
          _
        $region28: #{tpu_custom_call.1} parent=11 // pred_fallthru
          _
        // Predicated region
        $region29: #{tpu_custom_call.1} parent=11 // pred_check
          %p345 = pneg %p164
        $region30: #{tpu_custom_call.1} parent=11 // pred_check_branch
          %347 = sbr.rel (%p345) target = $region32
        $region31: #{tpu_custom_call.1} parent=11 // pred_region
          _
        $region32: #{tpu_custom_call.1} parent=11 // pred_fallthru
          _
        // Predicated region
        $region33: #{tpu_custom_call.1} parent=11 // pred_check
          %p348 = pneg %p185
        $region34: #{tpu_custom_call.1} parent=11 // pred_check_branch
          %350 = sbr.rel (%p348) target = $region36
        $region35: #{tpu_custom_call.1} parent=11 // pred_region
          _
        $region36: #{tpu_custom_call.1} parent=11 // pred_fallthru
          _
        // Predicated region
        $region37: #{tpu_custom_call.1} parent=11 // pred_check
          %p351 = pneg %p206
        $region38: #{tpu_custom_call.1} parent=11 // pred_check_branch
          %353 = sbr.rel (%p351) target = $region40
        $region39: #{tpu_custom_call.1} parent=11 // pred_region
          _
        $region40: #{tpu_custom_call.1} parent=11 // pred_fallthru
          _
        // Predicated region
        $region41: #{tpu_custom_call.1} parent=11 // pred_check
          %p354 = pneg %p227
        $region42: #{tpu_custom_call.1} parent=11 // pred_check_branch
          %356 = sbr.rel (%p354) target = $region44
        $region43: #{tpu_custom_call.1} parent=11 // pred_region
          _
        $region44: #{tpu_custom_call.1} parent=11 // pred_fallthru
          _
        // Predicated region
        $region45: #{tpu_custom_call.1} parent=11 // pred_check
          %p357 = pneg %p248
        $region46: #{tpu_custom_call.1} parent=11 // pred_check_branch
          %359 = sbr.rel (%p357) target = $region48
        $region47: #{tpu_custom_call.1} parent=11 // pred_region
          _
        $region48: #{tpu_custom_call.1} parent=11 // pred_fallthru
          _
        // Predicated region
        $region49: #{tpu_custom_call.1} parent=11 // pred_check
          %p360 = pneg %p269
        $region50: #{tpu_custom_call.1} parent=11 // pred_check_branch
          %362 = sbr.rel (%p360) target = $region52
        $region51: #{tpu_custom_call.1} parent=11 // pred_region
          _
        $region52: #{tpu_custom_call.1} parent=11 // pred_fallthru
          _
        // Predicated region
        $region53: #{tpu_custom_call.1} parent=11 // pred_check
          %p363 = pneg %p290
        $region54: #{tpu_custom_call.1} parent=11 // pred_check_branch
          %365 = sbr.rel (%p363) target = $region56
        $region55: #{tpu_custom_call.1} parent=11 // pred_region
          _
        $region56: #{tpu_custom_call.1} parent=11 // pred_fallthru
          _
      $region12: #{tpu_custom_call.1} parent=5 // pred_fallthru
        _
      %p366 = scmp.lt.s32.totalorder %s21, 2
      // Predicated region
      $region57: #{tpu_custom_call.1} parent=5 // pred_check
        %p367 = pneg %p366
      $region58: #{tpu_custom_call.1} parent=5 // pred_check_branch
        %369 = sbr.rel (%p367) target = $region60
      $region59: #{tpu_custom_call.1} parent=5 // pred_region
        // Predicated region
        $region61: #{tpu_custom_call.1} parent=59 // pred_check
          %p370 = pneg %p53
        $region62: #{tpu_custom_call.1} parent=59 // pred_check_branch
          %372 = sbr.rel (%p370) target = $region64
        $region63: #{tpu_custom_call.1} parent=59 // pred_region
          %p373 = scmp.lt.s32.totalorder %s28, 1
          %s374 = scalar_select %p373, %s28, 1
          %s375 = smul.addr %s374, 8
          %s376 = scalar_lea.vmem %s0, %s375
        $region64: #{tpu_custom_call.1} parent=59 // pred_fallthru
          _
      $region60: #{tpu_custom_call.1} parent=5 // pred_fallthru
        _
      %p377 = scmp.le.s32.totalorder 1, %s21
      %p378 = scmp.lt.s32.totalorder %s21, 3
      %p379 = pnand %p377, %p378
      %p380 = pneg %p379
      // Predicated region
      $region65: #{tpu_custom_call.1} parent=5 // pred_check
        _
      $region66: #{tpu_custom_call.1} parent=5 // pred_check_branch
        %382 = sbr.rel (%p379) target = $region68
      $region67: #{tpu_custom_call.1} parent=5 // pred_region
        %s383 = ssub.s32 %s21, 1
        %p384 = scmp.lt.s32.totalorder %s30, 1
        %s385 = scalar_select %p384, %s30, 1
        %s386 = smul.addr %s385, 8
        %s387 = scalar_lea.vmem %s0, %s386
        %p388 = pneg %p59
        %p389 = pneg %p56
        %p390 = pneg %p80
        %p391 = pneg %p77
        %p392 = pneg %p101
        %p393 = pneg %p98
        %p394 = pneg %p122
        %p395 = pneg %p119
        %p396 = pneg %p143
        %p397 = pneg %p140
        %p398 = pneg %p164
        %p399 = pneg %p161
        %p400 = pneg %p185
        %p401 = pneg %p182
        %p402 = pneg %p206
        %p403 = pneg %p203
        %p404 = pneg %p227
        %p405 = pneg %p224
        %p406 = pneg %p248
        %p407 = pneg %p245
        %p408 = pneg %p269
        %p409 = pneg %p266
        %p410 = pneg %p290
        %p411 = pneg %p287
        %p412 = pneg %p318
        %p413 = pneg %p315
        %s414 = sand.u32 %s305, 1
        %s415 = scalar_lea.sflag [#allocation5], %s414
        %s416 = sand.u32 %s305, 1
        %s417 = smul.addr %s416, 8
        %s418 = scalar_lea.vmem [#allocation4], %s417
        %p419 = scmp.lt.s32.totalorder %s30, 1
        %s420 = scalar_select %p419, %s30, 1
        %s421 = smul.addr %s420, 8
        %s422 = scalar_lea.vmem %s0, %s421
        %s424 = smul.u32 %s31, 8
        %p425 = scmp.eq.s32.totalorder %s31, 0
        // Predicated region
        $region69: #{tpu_custom_call.1} parent=67 // pred_check
          %p426 = pneg %p425
        $region70: #{tpu_custom_call.1} parent=67 // pred_check_branch
          %428 = sbr.rel (%p426) target = $region72
        $region71: #{tpu_custom_call.1} parent=67 // pred_region
          %v429 = vld [vmem:[%s422] sm:$0xff]
          %v430 = vld [vmem:[%s1] sm:$0x1]
          %v431 = vld [vmem:[%s2] sm:$0x1]
          %vm432 = vcmask 261120
          %v433 = vsel %vm432, %v429, 0.0
          %434 = vadd.xlane.f32.xlu0 %v433
          %v435 = vpop.xlane.xlu0 %434
          %v436 = vrcp.pop 32.0
          %v437 = vmul.f32 32.0, %v436
          %v438 = vsub.f32 1.0, %v437
          %v439 = vmul.f32 %v436, %v438
          %v440 = vadd.f32 %v436, %v439
          %vm441 = vweird.f32 %v436
          %v442 = vsel %vm441, %v436, %v440
          %v443 = vmul.f32 %v435, %v442
          %v444 = vsub.f32 %v429, %v443
          %v445 = vmul.f32 %v444, %v444
          %v446 = vsel %vm432, %v445, 0.0
          %447 = vadd.xlane.f32.xlu0 %v446
          %v448 = vpop.xlane.xlu0 %447
          %v449 = vmul.f32 %v448, %v442
          %v450 = vadd.f32 %v449, 1e-05
          %v451 = vrsqrt.pop %v450
          %v452 = vmul.f32 %v451, %v450
          %v453 = vmul.f32 %v452, %v451
          %v454 = vmul.f32 0.5, %v453
          %v455 = vsub.f32 1.5, %v454
          %v456 = vmul.f32 %v451, %v455
          %vm457 = vweird.f32 %v450
          %vm458 = vweird.f32 %v451
          %vm459 = vmor %vm457, %vm458
          %v460 = vsel %vm459, %v451, %v456
          %v461 = vmul.f32 %v444, %v460
          %v463 = vperm.slane %v430, 0
          %v465 = vmul.f32 %v461, %v463
          %v467 = vperm.slane %v431, 0
          %v469 = vadd.f32 %v465, %v467
          %v470 = vpack.c.bf16 %v469, %v469
          %v471 = vld [vmem:[%s3] sm:$0xf]
          %v472 = vld [vmem:[%s3 + $0x4] sm:$0xf]
          %v473 = vld [vmem:[%s3 + $0x8] sm:$0xf]
          %v474 = vld [vmem:[%s3 + $0xc] sm:$0xf]
          %v479 = vunpack.c.l.b16 %v471
          %v480 = vunpack.c.l.b16 %v472
          %v481 = vunpack.c.l.b16 %v473
          %v482 = vunpack.c.l.b16 %v474
          %v483 = vpack.c.b16 %v480, %v479
          %v484 = vpack.c.b16 %v482, %v481
          %485 = vrot.lane.b32.xlu0 %v483, 96
          %v486 = vpop.permute.xlu0 %485
          %487 = vrot.lane.b32.xlu0 %v484, 96
          %v488 = vpop.permute.xlu0 %487
          %v492 = vsel %vm432, %v470, 0
          %494 = vmatpush.bf16.msra.mxu0 0
          %495 = vmatpush.bf16.msra.mxu0 0
          %496 = vmatpush.bf16.msra.mxu0 0
          %497 = vmatpush.bf16.msra.mxu0 0
          %498 = vmatpush.bf16.msra.mxu0 0
          %499 = vmatpush.bf16.msra.mxu0 0
          %500 = vmatpush.bf16.msra.mxu0 %v488
          %501 = vmatpush.bf16.msra.mxu0 %v486
          %502 = vmatmul.bf16.gmra.mxu0 %v492
          %v503 = vpop.f32.mrf.mxu0
          %v504 = vadd.f32 0.0, %v503
          %v505 = vpop.f32.mrf.mxu0
          %506 = vdwg.mxu0
          %v507 = vpack.c.bf16 %v504, %v504
          %509 = vrot.lane.b32.xlu0 %v507, 120
          %v510 = vpop.permute.xlu0 %509
          %511 = vrot.lane.b32.xlu0 %v507, 112
          %v512 = vpop.permute.xlu0 %511
          %513 = vrot.lane.b32.xlu0 %v507, 104
          %v514 = vpop.permute.xlu0 %513
          %v517 = vpack.i.b16 %v510, %v507
          %v518 = vshrl.u32 %v507, 16
          %v519 = vshrl.u32 %v510, 16
          %v520 = vpack.i.b16 %v519, %v518
          %v523 = vpack.i.b16 %v514, %v512
          %v524 = vshrl.u32 %v512, 16
          %v525 = vshrl.u32 %v514, 16
          %v526 = vpack.i.b16 %v525, %v524
          %v529 = vunpack.c.l.s4 1983009808
          %v530 = vunpack.c.0.s8 %v529
          %v531 = vperm.slane %v517, %v530
          %v534 = vunpack.c.l.s4 1983009808
          %v535 = vunpack.c.0.s8 %v534
          %v536 = vperm.slane %v523, %v535
          %v537 = vrot.slane %v536, 4
          %vm538 = vcmask 1047556
          %v539 = vsel %vm538, %v537, %v531
          %v540 = vrot.slane %v531, 4
          %v541 = vsel %vm538, %v536, %v540
          %v543 = vunpack.c.l.s4 1934713408
          %v544 = vunpack.c.0.s8 %v543
          %v545 = vperm.slane %v539, %v544
          %v547 = vunpack.c.l.s4 1934713408
          %v548 = vunpack.c.0.s8 %v547
          %v549 = vperm.slane %v541, %v548
          %v550 = vrot.slane %v545, 4
          %v551 = vsel %vm538, 0, %v550
          %v552 = vrot.slane %v549, 4
          %v553 = vsel %vm538, 0, %v552
          %v556 = vunpack.c.l.s4 1983009808
          %v557 = vunpack.c.0.s8 %v556
          %v558 = vperm.slane %v520, %v557
          %v561 = vunpack.c.l.s4 1983009808
          %v562 = vunpack.c.0.s8 %v561
          %v563 = vperm.slane %v526, %v562
          %v564 = vrot.slane %v563, 4
          %v565 = vsel %vm538, %v564, %v558
          %v566 = vrot.slane %v558, 4
          %v567 = vsel %vm538, %v563, %v566
          %v569 = vunpack.c.l.s4 1934713408
          %v570 = vunpack.c.0.s8 %v569
          %v571 = vperm.slane %v565, %v570
          %v573 = vunpack.c.l.s4 1934713408
          %v574 = vunpack.c.0.s8 %v573
          %v575 = vperm.slane %v567, %v574
          %v576 = vrot.slane %v571, 4
          %v577 = vsel %vm538, 0, %v576
          %v578 = vrot.slane %v575, 4
          %v579 = vsel %vm538, 0, %v578
          %580 = vrot.lane.b32.xlu0 %v507, 96
          %v581 = vpop.permute.xlu0 %580
          %582 = vrot.lane.b32.xlu0 %v510, 96
          %v583 = vpop.permute.xlu0 %582
          %584 = vrot.lane.b32.xlu0 %v512, 96
          %v585 = vpop.permute.xlu0 %584
          %586 = vrot.lane.b32.xlu0 %v514, 96
          %v587 = vpop.permute.xlu0 %586
          %v590 = vpack.i.b16 %v583, %v581
          %v591 = vshrl.u32 %v581, 16
          %v592 = vshrl.u32 %v583, 16
          %v593 = vpack.i.b16 %v592, %v591
          %v596 = vpack.i.b16 %v587, %v585
          %v597 = vshrl.u32 %v585, 16
          %v598 = vshrl.u32 %v587, 16
          %v599 = vpack.i.b16 %v598, %v597
          %v602 = vunpack.c.l.s4 1983009808
          %v603 = vunpack.c.0.s8 %v602
          %v604 = vperm.slane %v590, %v603
          %v607 = vunpack.c.l.s4 1983009808
          %v608 = vunpack.c.0.s8 %v607
          %v609 = vperm.slane %v596, %v608
          %v610 = vrot.slane %v609, 4
          %v611 = vsel %vm538, %v610, %v604
          %v612 = vrot.slane %v604, 4
          %v613 = vsel %vm538, %v609, %v612
          %v615 = vunpack.c.l.s4 1934713408
          %v616 = vunpack.c.0.s8 %v615
          %v617 = vperm.slane %v611, %v616
          %v619 = vunpack.c.l.s4 1934713408
          %v620 = vunpack.c.0.s8 %v619
          %v621 = vperm.slane %v613, %v620
          %v622 = vrot.slane %v617, 4
          %v623 = vsel %vm538, 0, %v622
          %v624 = vrot.slane %v621, 4
          %v625 = vsel %vm538, 0, %v624
          %v628 = vunpack.c.l.s4 1983009808
          %v629 = vunpack.c.0.s8 %v628
          %v630 = vperm.slane %v593, %v629
          %v633 = vunpack.c.l.s4 1983009808
          %v634 = vunpack.c.0.s8 %v633
          %v635 = vperm.slane %v599, %v634
          %v636 = vrot.slane %v635, 4
          %v637 = vsel %vm538, %v636, %v630
          %v638 = vrot.slane %v630, 4
          %v639 = vsel %vm538, %v635, %v638
          %v641 = vunpack.c.l.s4 1934713408
          %v642 = vunpack.c.0.s8 %v641
          %v643 = vperm.slane %v637, %v642
          %v645 = vunpack.c.l.s4 1934713408
          %v646 = vunpack.c.0.s8 %v645
          %v647 = vperm.slane %v639, %v646
          %v648 = vrot.slane %v643, 4
          %v649 = vsel %vm538, 0, %v648
          %v650 = vrot.slane %v647, 4
          %v651 = vsel %vm538, 0, %v650
          %v652 = vsel %vm538, %v552, %v545
          %v654 = vunpack.c.l.s4 1983009808
          %v655 = vunpack.c.0.s8 %v654
          %v656 = vperm.slane %v652, %v655
          %v657 = vrot.slane %v553, 4
          %v658 = vsel %vm538, %v657, %v551
          %v660 = vunpack.c.l.s4 1983009808
          %v661 = vunpack.c.0.s8 %v660
          %v662 = vperm.slane %v658, %v661
          %v663 = vrot.slane %v662, 4
          %v664 = vsel %vm538, %v663, %v656
          %v666 = vunpack.c.l.s4 1934713408
          %v667 = vunpack.c.0.s8 %v666
          %v668 = vperm.slane %v664, %v667
          %v669 = vrot.slane %v668, 4
          %v670 = vsel %vm538, 0, %v669
          %v671 = vsel %vm538, %v578, %v571
          %v673 = vunpack.c.l.s4 1983009808
          %v674 = vunpack.c.0.s8 %v673
          %v675 = vperm.slane %v671, %v674
          %v676 = vrot.slane %v579, 4
          %v677 = vsel %vm538, %v676, %v577
          %v679 = vunpack.c.l.s4 1983009808
          %v680 = vunpack.c.0.s8 %v679
          %v681 = vperm.slane %v677, %v680
          %v682 = vrot.slane %v681, 4
          %v683 = vsel %vm538, %v682, %v675
          %v685 = vunpack.c.l.s4 1934713408
          %v686 = vunpack.c.0.s8 %v685
          %v687 = vperm.slane %v683, %v686
          %v688 = vrot.slane %v687, 4
          %v689 = vsel %vm538, 0, %v688
          %v692 = vpack.i.b16 %v687, %v668
          %v694 = vshrl.u32 %v668, 16
          %v695 = vshrl.u32 %v687, 16
          %v696 = vpack.i.b16 %v695, %v694
          %v700 = vpack.i.b16 %v689, %v670
          %v702 = vshrl.u32 %v670, 16
          %v703 = vshrl.u32 %v689, 16
          %v704 = vpack.i.b16 %v703, %v702
          %vm706 = vcmask 60416
          %707 = vst.msk [vmem:[#allocation2] sm:$0xf] %vm706, %v692
          %708 = vst.msk [vmem:[#allocation2 + $0x4] sm:$0xf] %vm706, %v696
          %709 = vst.msk [vmem:[#allocation2 + $0x8] sm:$0xf] %vm706, %v700
          %710 = vst.msk [vmem:[#allocation2 + $0xc] sm:$0xf] %vm706, %v704
          %v711 = vsel %vm538, %v624, %v617
          %v713 = vunpack.c.l.s4 1983009808
          %v714 = vunpack.c.0.s8 %v713
          %v715 = vperm.slane %v711, %v714
          %v716 = vrot.slane %v625, 4
          %v717 = vsel %vm538, %v716, %v623
          %v719 = vunpack.c.l.s4 1983009808
          %v720 = vunpack.c.0.s8 %v719
          %v721 = vperm.slane %v717, %v720
          %v722 = vrot.slane %v721, 4
          %v723 = vsel %vm538, %v722, %v715
          %v725 = vunpack.c.l.s4 1934713408
          %v726 = vunpack.c.0.s8 %v725
          %v727 = vperm.slane %v723, %v726
          %v728 = vrot.slane %v727, 4
          %v729 = vsel %vm538, 0, %v728
          %v730 = vsel %vm538, %v650, %v643
          %v732 = vunpack.c.l.s4 1983009808
          %v733 = vunpack.c.0.s8 %v732
          %v734 = vperm.slane %v730, %v733
          %v735 = vrot.slane %v651, 4
          %v736 = vsel %vm538, %v735, %v649
          %v738 = vunpack.c.l.s4 1983009808
          %v739 = vunpack.c.0.s8 %v738
          %v740 = vperm.slane %v736, %v739
          %v741 = vrot.slane %v740, 4
          %v742 = vsel %vm538, %v741, %v734
          %v744 = vunpack.c.l.s4 1934713408
          %v745 = vunpack.c.0.s8 %v744
          %v746 = vperm.slane %v742, %v745
          %v747 = vrot.slane %v746, 4
          %v748 = vsel %vm538, 0, %v747
          %v751 = vpack.i.b16 %v746, %v727
          %v753 = vshrl.u32 %v727, 16
          %v754 = vshrl.u32 %v746, 16
          %v755 = vpack.i.b16 %v754, %v753
          %v759 = vpack.i.b16 %v748, %v729
          %v761 = vshrl.u32 %v729, 16
          %v762 = vshrl.u32 %v748, 16
          %v763 = vpack.i.b16 %v762, %v761
          %765 = vst.msk [vmem:[#allocation3] sm:$0xf] %vm706, %v751
          %766 = vst.msk [vmem:[#allocation3 + $0x4] sm:$0xf] %vm706, %v755
          %767 = vst.msk [vmem:[#allocation3 + $0x8] sm:$0xf] %vm706, %v759
          %768 = vst.msk [vmem:[#allocation3 + $0xc] sm:$0xf] %vm706, %v763
        $region72: #{tpu_custom_call.1} parent=67 // pred_fallthru
          _
        %s769 = scalar_lea.vmem %s422, %s424
        %v770 = vld [vmem:[%s769] sm:$0xff]
        %v771 = vld [vmem:[%s1] sm:$0x1]
        %v772 = vld [vmem:[%s2] sm:$0x1]
        %vm773 = vcmask 261120
        %v774 = vsel %vm773, %v770, 0.0
        %775 = vadd.xlane.f32.xlu0 %v774
        %v776 = vpop.xlane.xlu0 %775
        %v777 = vrcp.pop 32.0
        %v778 = vmul.f32 32.0, %v777
        %v779 = vsub.f32 1.0, %v778
        %v780 = vmul.f32 %v777, %v779
        %v781 = vadd.f32 %v777, %v780
        %vm782 = vweird.f32 %v777
        %v783 = vsel %vm782, %v777, %v781
        %v784 = vmul.f32 %v776, %v783
        %v785 = vsub.f32 %v770, %v784
        %v786 = vmul.f32 %v785, %v785
        %v787 = vsel %vm773, %v786, 0.0
        %788 = vadd.xlane.f32.xlu0 %v787
        %v789 = vpop.xlane.xlu0 %788
        %v790 = vmul.f32 %v789, %v783
        %v791 = vadd.f32 %v790, 1e-05
        %v792 = vrsqrt.pop %v791
        %v793 = vmul.f32 %v792, %v791
        %v794 = vmul.f32 %v793, %v792
        %v795 = vmul.f32 0.5, %v794
        %v796 = vsub.f32 1.5, %v795
        %v797 = vmul.f32 %v792, %v796
        %vm798 = vweird.f32 %v791
        %vm799 = vweird.f32 %v792
        %vm800 = vmor %vm798, %vm799
        %v801 = vsel %vm800, %v792, %v797
        %v802 = vmul.f32 %v785, %v801
        %v804 = vperm.slane %v771, 0
        %v806 = vmul.f32 %v802, %v804
        %v808 = vperm.slane %v772, 0
        %v810 = vadd.f32 %v806, %v808
        %v811 = vmul.f32 %v810, 0.35355338
        %v812 = vpack.c.bf16 %v811, %v811
        %v813 = vld [vmem:[%s3] sm:$0xf]
        %v814 = vld [vmem:[%s3 + $0x4] sm:$0xf]
        %v815 = vld [vmem:[%s3 + $0x8] sm:$0xf]
        %v816 = vld [vmem:[%s3 + $0xc] sm:$0xf]
        %v821 = vunpack.c.l.b16 %v813
        %v822 = vunpack.c.l.b16 %v814
        %v823 = vunpack.c.l.b16 %v815
        %v824 = vunpack.c.l.b16 %v816
        %v825 = vpack.c.b16 %v822, %v821
        %v826 = vpack.c.b16 %v824, %v823
        %v830 = vsel %vm773, %v812, 0
        %832 = vmatpush.bf16.msra.mxu0 0
        %833 = vmatpush.bf16.msra.mxu0 0
        %834 = vmatpush.bf16.msra.mxu0 0
        %835 = vmatpush.bf16.msra.mxu0 0
        %836 = vmatpush.bf16.msra.mxu0 0
        %837 = vmatpush.bf16.msra.mxu0 0
        %838 = vmatpush.bf16.msra.mxu0 %v826
        %839 = vmatpush.bf16.msra.mxu0 %v825
        %840 = vmatmul.bf16.gmra.mxu0 %v830
        %v841 = vpop.f32.mrf.mxu0
        %v842 = vadd.f32 0.0, %v841
        %v843 = vpop.f32.mrf.mxu0
        %844 = vdwg.mxu0
        %v845 = vpack.c.bf16 %v842, %v842
        %847 = vrot.lane.b32.xlu0 %v845, 120
        %v848 = vpop.permute.xlu0 %847
        %849 = vrot.lane.b32.xlu0 %v845, 112
        %v850 = vpop.permute.xlu0 %849
        %851 = vrot.lane.b32.xlu0 %v845, 104
        %v852 = vpop.permute.xlu0 %851
        %v855 = vpack.i.b16 %v848, %v845
        %v856 = vshrl.u32 %v845, 16
        %v857 = vshrl.u32 %v848, 16
        %v858 = vpack.i.b16 %v857, %v856
        %v861 = vpack.i.b16 %v852, %v850
        %v862 = vshrl.u32 %v850, 16
        %v863 = vshrl.u32 %v852, 16
        %v864 = vpack.i.b16 %v863, %v862
        %v867 = vunpack.c.l.s4 1983009808
        %v868 = vunpack.c.0.s8 %v867
        %v869 = vperm.slane %v855, %v868
        %v872 = vunpack.c.l.s4 1983009808
        %v873 = vunpack.c.0.s8 %v872
        %v874 = vperm.slane %v861, %v873
        %v875 = vrot.slane %v874, 4
        %vm876 = vcmask 1047556
        %v877 = vsel %vm876, %v875, %v869
        %v878 = vrot.slane %v869, 4
        %v879 = vsel %vm876, %v874, %v878
        %v881 = vunpack.c.l.s4 1934713408
        %v882 = vunpack.c.0.s8 %v881
        %v883 = vperm.slane %v877, %v882
        %v885 = vunpack.c.l.s4 1934713408
        %v886 = vunpack.c.0.s8 %v885
        %v887 = vperm.slane %v879, %v886
        %v888 = vrot.slane %v883, 4
        %v889 = vsel %vm876, 0, %v888
        %v890 = vrot.slane %v887, 4
        %v891 = vsel %vm876, 0, %v890
        %v894 = vunpack.c.l.s4 1983009808
        %v895 = vunpack.c.0.s8 %v894
        %v896 = vperm.slane %v858, %v895
        %v899 = vunpack.c.l.s4 1983009808
        %v900 = vunpack.c.0.s8 %v899
        %v901 = vperm.slane %v864, %v900
        %v902 = vrot.slane %v901, 4
        %v903 = vsel %vm876, %v902, %v896
        %v904 = vrot.slane %v896, 4
        %v905 = vsel %vm876, %v901, %v904
        %v907 = vunpack.c.l.s4 1934713408
        %v908 = vunpack.c.0.s8 %v907
        %v909 = vperm.slane %v903, %v908
        %v911 = vunpack.c.l.s4 1934713408
        %v912 = vunpack.c.0.s8 %v911
        %v913 = vperm.slane %v905, %v912
        %v914 = vrot.slane %v909, 4
        %v915 = vsel %vm876, 0, %v914
        %v916 = vrot.slane %v913, 4
        %v917 = vsel %vm876, 0, %v916
        %v918 = vsel %vm876, %v890, %v883
        %v920 = vunpack.c.l.s4 1983009808
        %v921 = vunpack.c.0.s8 %v920
        %v922 = vperm.slane %v918, %v921
        %v923 = vrot.slane %v891, 4
        %v924 = vsel %vm876, %v923, %v889
        %v926 = vunpack.c.l.s4 1983009808
        %v927 = vunpack.c.0.s8 %v926
        %v928 = vperm.slane %v924, %v927
        %v929 = vrot.slane %v928, 4
        %v930 = vsel %vm876, %v929, %v922
        %v932 = vunpack.c.l.s4 1934713408
        %v933 = vunpack.c.0.s8 %v932
        %v934 = vperm.slane %v930, %v933
        %v935 = vrot.slane %v934, 4
        %v936 = vsel %vm876, 0, %v935
        %v937 = vsel %vm876, %v916, %v909
        %v939 = vunpack.c.l.s4 1983009808
        %v940 = vunpack.c.0.s8 %v939
        %v941 = vperm.slane %v937, %v940
        %v942 = vrot.slane %v917, 4
        %v943 = vsel %vm876, %v942, %v915
        %v945 = vunpack.c.l.s4 1983009808
        %v946 = vunpack.c.0.s8 %v945
        %v947 = vperm.slane %v943, %v946
        %v948 = vrot.slane %v947, 4
        %v949 = vsel %vm876, %v948, %v941
        %v951 = vunpack.c.l.s4 1934713408
        %v952 = vunpack.c.0.s8 %v951
        %v953 = vperm.slane %v949, %v952
        %v954 = vrot.slane %v953, 4
        %v955 = vsel %vm876, 0, %v954
        %v958 = vpack.i.b16 %v953, %v934
        %v959 = vshrl.u32 %v934, 16
        %v960 = vshrl.u32 %v953, 16
        %v961 = vpack.i.b16 %v960, %v959
        %v964 = vpack.i.b16 %v955, %v936
        %v965 = vshrl.u32 %v936, 16
        %v966 = vshrl.u32 %v955, 16
        %v967 = vpack.i.b16 %v966, %v965
        %v968 = vld [vmem:[#allocation2] sm:$0xf]
        %v969 = vld [vmem:[#allocation2 + $0x4] sm:$0xf]
        %v970 = vld [vmem:[#allocation2 + $0x8] sm:$0xf]
        %v971 = vld [vmem:[#allocation2 + $0xc] sm:$0xf]
        %v972 = vlaneseq
        %v973 = vshrl.u32 %v972, 7
        %v974 = vlaneseq
        %v975 = vand.u32 %v974, 127
        %v976 = vstv %s424
        %v977 = vadd.s32 %v973, %v976
        %vm978 = vcmp.le.s32.totalorder %v975, %v977
        %v979 = vsel %vm978, 0.0, -1e+30
        %vm980 = vcmask 64512
        %v982 = vsel %vm980, %v958, 0
        %v985 = vsel %vm980, %v968, 0
        %987 = vmatpush.bf16.xpose.msra.mxu0 0
        %988 = vmatpush.bf16.xpose.msra.mxu0 0
        %989 = vmatpush.bf16.xpose.msra.mxu0 0
        %990 = vmatpush.bf16.xpose.msra.mxu0 0
        %991 = vmatpush.bf16.xpose.msra.mxu0 0
        %992 = vmatpush.bf16.xpose.msra.mxu0 0
        %993 = vmatpush.bf16.xpose.msra.mxu0 0
        %994 = vmatpush.bf16.xpose.msra.mxu0 %v985
        %995 = vmatmul.bf16.gmra.mxu0 %v982
        %v996 = vpop.f32.mrf.mxu0
        %v997 = vadd.f32 %v979, %v996
        %v998 = vpop.f32.mrf.mxu0
        %999 = vdwg.mxu0
        %v1001 = vsel %vm980, %v961, 0
        %v1004 = vsel %vm980, %v969, 0
        %1006 = vmatpush.bf16.xpose.msra.mxu0 0
        %1007 = vmatpush.bf16.xpose.msra.mxu0 0
        %1008 = vmatpush.bf16.xpose.msra.mxu0 0
        %1009 = vmatpush.bf16.xpose.msra.mxu0 0
        %1010 = vmatpush.bf16.xpose.msra.mxu0 0
        %1011 = vmatpush.bf16.xpose.msra.mxu0 0
        %1012 = vmatpush.bf16.xpose.msra.mxu0 0
        %1013 = vmatpush.bf16.xpose.msra.mxu0 %v1004
        %1014 = vmatmul.bf16.gmra.mxu0 %v1001
        %v1015 = vpop.f32.mrf.mxu0
        %v1016 = vadd.f32 %v979, %v1015
        %v1017 = vpop.f32.mrf.mxu0
        %1018 = vdwg.mxu0
        %v1020 = vsel %vm980, %v964, 0
        %v1023 = vsel %vm980, %v970, 0
        %1025 = vmatpush.bf16.xpose.msra.mxu0 0
        %1026 = vmatpush.bf16.xpose.msra.mxu0 0
        %1027 = vmatpush.bf16.xpose.msra.mxu0 0
        %1028 = vmatpush.bf16.xpose.msra.mxu0 0
        %1029 = vmatpush.bf16.xpose.msra.mxu0 0
        %1030 = vmatpush.bf16.xpose.msra.mxu0 0
        %1031 = vmatpush.bf16.xpose.msra.mxu0 0
        %1032 = vmatpush.bf16.xpose.msra.mxu0 %v1023
        %1033 = vmatmul.bf16.gmra.mxu0 %v1020
        %v1034 = vpop.f32.mrf.mxu0
        %v1035 = vadd.f32 %v979, %v1034
        %v1036 = vpop.f32.mrf.mxu0
        %1037 = vdwg.mxu0
        %v1039 = vsel %vm980, %v967, 0
        %v1042 = vsel %vm980, %v971, 0
        %1044 = vmatpush.bf16.xpose.msra.mxu0 0
        %1045 = vmatpush.bf16.xpose.msra.mxu0 0
        %1046 = vmatpush.bf16.xpose.msra.mxu0 0
        %1047 = vmatpush.bf16.xpose.msra.mxu0 0
        %1048 = vmatpush.bf16.xpose.msra.mxu0 0
        %1049 = vmatpush.bf16.xpose.msra.mxu0 0
        %1050 = vmatpush.bf16.xpose.msra.mxu0 0
        %1051 = vmatpush.bf16.xpose.msra.mxu0 %v1042
        %1052 = vmatmul.bf16.gmra.mxu0 %v1039
        %v1053 = vpop.f32.mrf.mxu0
        %v1054 = vadd.f32 %v979, %v1053
        %v1055 = vpop.f32.mrf.mxu0
        %1056 = vdwg.mxu0
        %v1057 = vsel %vm980, %v997, -inf
        %1058 = vmax.xlane.f32.xlu0 %v1057
        %v1059 = vpop.xlane.xlu0 %1058
        %v1060 = vsel %vm980, %v1016, -inf
        %1061 = vmax.xlane.f32.xlu0 %v1060
        %v1062 = vpop.xlane.xlu0 %1061
        %v1063 = vsel %vm980, %v1035, -inf
        %1064 = vmax.xlane.f32.xlu0 %v1063
        %v1065 = vpop.xlane.xlu0 %1064
        %v1066 = vsel %vm980, %v1054, -inf
        %1067 = vmax.xlane.f32.xlu0 %v1066
        %v1068 = vpop.xlane.xlu0 %1067
        %v1069 = vsub.f32 %v997, %v1059
        %v1070 = vsub.f32 %v1016, %v1062
        %v1071 = vsub.f32 %v1035, %v1065
        %v1072 = vsub.f32 %v1054, %v1068
        %v1073 = vmul.f32 %v1069, 1.442695
        %v1074 = vpow.pop %v1073
        %v1075 = vmul.f32 %v1070, 1.442695
        %v1076 = vpow.pop %v1075
        %v1077 = vmul.f32 %v1071, 1.442695
        %v1078 = vpow.pop %v1077
        %v1079 = vmul.f32 %v1072, 1.442695
        %v1080 = vpow.pop %v1079
        %v1081 = vsel %vm980, %v1074, 0.0
        %1082 = vadd.xlane.f32.xlu0 %v1081
        %v1083 = vpop.xlane.xlu0 %1082
        %v1084 = vsel %vm980, %v1076, 0.0
        %1085 = vadd.xlane.f32.xlu0 %v1084
        %v1086 = vpop.xlane.xlu0 %1085
        %v1087 = vsel %vm980, %v1078, 0.0
        %1088 = vadd.xlane.f32.xlu0 %v1087
        %v1089 = vpop.xlane.xlu0 %1088
        %v1090 = vsel %vm980, %v1080, 0.0
        %1091 = vadd.xlane.f32.xlu0 %v1090
        %v1092 = vpop.xlane.xlu0 %1091
        %v1093 = vrcp.pop %v1083
        %v1094 = vrcp.pop %v1086
        %v1095 = vrcp.pop %v1089
        %v1096 = vrcp.pop %v1092
        %v1097 = vmul.f32 %v1074, %v1093
        %v1098 = vmul.f32 %v1076, %v1094
        %v1099 = vmul.f32 %v1078, %v1095
        %v1100 = vmul.f32 %v1080, %v1096
        %v1101 = vpack.c.bf16 %v1097, %v1097
        %v1102 = vpack.c.bf16 %v1098, %v1098
        %v1103 = vpack.c.bf16 %v1099, %v1099
        %v1104 = vpack.c.bf16 %v1100, %v1100
        %v1105 = vld [vmem:[#allocation3] sm:$0xf]
        %v1106 = vld [vmem:[#allocation3 + $0x4] sm:$0xf]
        %v1107 = vld [vmem:[#allocation3 + $0x8] sm:$0xf]
        %v1108 = vld [vmem:[#allocation3 + $0xc] sm:$0xf]
        %v1110 = vsel %vm980, %v1101, 0
        %vm1112 = vcmask 1043456
        %v1114 = vsel %vm1112, %v1105, 0
        %1116 = vmatpush.bf16.msra.mxu0 0
        %1117 = vmatpush.bf16.msra.mxu0 0
        %1118 = vmatpush.bf16.msra.mxu0 0
        %1119 = vmatpush.bf16.msra.mxu0 0
        %1120 = vmatpush.bf16.msra.mxu0 0
        %1121 = vmatpush.bf16.msra.mxu0 0
        %1122 = vmatpush.bf16.msra.mxu0 0
        %1123 = vmatpush.bf16.msra.mxu0 %v1114
        %1124 = vmatmul.bf16.gmra.mxu0 %v1110
        %v1125 = vpop.f32.mrf.mxu0
        %v1126 = vadd.f32 0.0, %v1125
        %v1127 = vpop.f32.mrf.mxu0
        %1128 = vdwg.mxu0
        %v1130 = vsel %vm980, %v1102, 0
        %v1133 = vsel %vm1112, %v1106, 0
        %1135 = vmatpush.bf16.msra.mxu0 0
        %1136 = vmatpush.bf16.msra.mxu0 0
        %1137 = vmatpush.bf16.msra.mxu0 0
        %1138 = vmatpush.bf16.msra.mxu0 0
        %1139 = vmatpush.bf16.msra.mxu0 0
        %1140 = vmatpush.bf16.msra.mxu0 0
        %1141 = vmatpush.bf16.msra.mxu0 0
        %1142 = vmatpush.bf16.msra.mxu0 %v1133
        %1143 = vmatmul.bf16.gmra.mxu0 %v1130
        %v1144 = vpop.f32.mrf.mxu0
        %v1145 = vadd.f32 0.0, %v1144
        %v1146 = vpop.f32.mrf.mxu0
        %1147 = vdwg.mxu0
        %v1149 = vsel %vm980, %v1103, 0
        %v1152 = vsel %vm1112, %v1107, 0
        %1154 = vmatpush.bf16.msra.mxu0 0
        %1155 = vmatpush.bf16.msra.mxu0 0
        %1156 = vmatpush.bf16.msra.mxu0 0
        %1157 = vmatpush.bf16.msra.mxu0 0
        %1158 = vmatpush.bf16.msra.mxu0 0
        %1159 = vmatpush.bf16.msra.mxu0 0
        %1160 = vmatpush.bf16.msra.mxu0 0
        %1161 = vmatpush.bf16.msra.mxu0 %v1152
        %1162 = vmatmul.bf16.gmra.mxu0 %v1149
        %v1163 = vpop.f32.mrf.mxu0
        %v1164 = vadd.f32 0.0, %v1163
        %v1165 = vpop.f32.mrf.mxu0
        %1166 = vdwg.mxu0
        %v1168 = vsel %vm980, %v1104, 0
        %v1171 = vsel %vm1112, %v1108, 0
        %1173 = vmatpush.bf16.msra.mxu0 0
        %1174 = vmatpush.bf16.msra.mxu0 0
        %1175 = vmatpush.bf16.msra.mxu0 0
        %1176 = vmatpush.bf16.msra.mxu0 0
        %1177 = vmatpush.bf16.msra.mxu0 0
        %1178 = vmatpush.bf16.msra.mxu0 0
        %1179 = vmatpush.bf16.msra.mxu0 0
        %1180 = vmatpush.bf16.msra.mxu0 %v1171
        %1181 = vmatmul.bf16.gmra.mxu0 %v1168
        %v1182 = vpop.f32.mrf.mxu0
        %v1183 = vadd.f32 0.0, %v1182
        %v1184 = vpop.f32.mrf.mxu0
        %1185 = vdwg.mxu0
        %v1186 = vrot.slane %v1164, 4
        %vm1187 = vcmask 1047556
        %v1188 = vsel %vm1187, %v1186, %v1126
        %v1189 = vrot.slane %v1126, 4
        %v1190 = vsel %vm1187, %v1164, %v1189
        %v1192 = vunpack.c.l.s4 1983009808
        %v1193 = vunpack.c.0.s8 %v1192
        %v1194 = vperm.slane %v1188, %v1193
        %v1196 = vunpack.c.l.s4 1983009808
        %v1197 = vunpack.c.0.s8 %v1196
        %v1198 = vperm.slane %v1190, %v1197
        %v1199 = vrot.slane %v1183, 4
        %v1200 = vsel %vm1187, %v1199, %v1145
        %v1201 = vrot.slane %v1145, 4
        %v1202 = vsel %vm1187, %v1183, %v1201
        %v1204 = vunpack.c.l.s4 1983009808
        %v1205 = vunpack.c.0.s8 %v1204
        %v1206 = vperm.slane %v1200, %v1205
        %v1208 = vunpack.c.l.s4 1983009808
        %v1209 = vunpack.c.0.s8 %v1208
        %v1210 = vperm.slane %v1202, %v1209
        %v1211 = vrot.slane %v1206, 4
        %v1212 = vsel %vm1187, %v1211, %v1194
        %v1213 = vrot.slane %v1194, 4
        %v1214 = vsel %vm1187, %v1206, %v1213
        %v1216 = vunpack.c.l.s4 1934713408
        %v1217 = vunpack.c.0.s8 %v1216
        %v1218 = vperm.slane %v1212, %v1217
        %v1220 = vunpack.c.l.s4 1934713408
        %v1221 = vunpack.c.0.s8 %v1220
        %v1222 = vperm.slane %v1214, %v1221
        %v1223 = vrot.slane %v1210, 4
        %v1224 = vsel %vm1187, %v1223, %v1198
        %v1225 = vrot.slane %v1198, 4
        %v1226 = vsel %vm1187, %v1210, %v1225
        %v1228 = vunpack.c.l.s4 1934713408
        %v1229 = vunpack.c.0.s8 %v1228
        %v1230 = vperm.slane %v1224, %v1229
        %v1232 = vunpack.c.l.s4 1934713408
        %v1233 = vunpack.c.0.s8 %v1232
        %v1234 = vperm.slane %v1226, %v1233
        %v1235 = vrot.slane %v1218, 4
        %v1236 = vsel %vm1187, 0.0, %v1235
        %v1237 = vrot.slane %v1222, 4
        %v1238 = vsel %vm1187, 0.0, %v1237
        %v1239 = vrot.slane %v1230, 4
        %v1240 = vsel %vm1187, 0.0, %v1239
        %v1241 = vrot.slane %v1234, 4
        %v1242 = vsel %vm1187, 0.0, %v1241
        %v1243 = vsel %vm1187, %v1237, %v1218
        %v1245 = vunpack.c.l.s4 1983009808
        %v1246 = vunpack.c.0.s8 %v1245
        %v1247 = vperm.slane %v1243, %v1246
        %v1248 = vrot.slane %v1238, 4
        %v1249 = vsel %vm1187, %v1248, %v1236
        %v1251 = vunpack.c.l.s4 1983009808
        %v1252 = vunpack.c.0.s8 %v1251
        %v1253 = vperm.slane %v1249, %v1252
        %v1254 = vsel %vm1187, %v1241, %v1230
        %v1256 = vunpack.c.l.s4 1983009808
        %v1257 = vunpack.c.0.s8 %v1256
        %v1258 = vperm.slane %v1254, %v1257
        %v1259 = vrot.slane %v1242, 4
        %v1260 = vsel %vm1187, %v1259, %v1240
        %v1262 = vunpack.c.l.s4 1983009808
        %v1263 = vunpack.c.0.s8 %v1262
        %v1264 = vperm.slane %v1260, %v1263
        %v1265 = vrot.slane %v1253, 4
        %v1266 = vsel %vm1187, %v1265, %v1247
        %v1267 = vrot.slane %v1247, 4
        %v1268 = vsel %vm1187, %v1253, %v1267
        %v1270 = vunpack.c.l.s4 1934713408
        %v1271 = vunpack.c.0.s8 %v1270
        %v1272 = vperm.slane %v1266, %v1271
        %v1274 = vunpack.c.l.s4 1934713408
        %v1275 = vunpack.c.0.s8 %v1274
        %v1276 = vperm.slane %v1268, %v1275
        %v1277 = vrot.slane %v1264, 4
        %v1278 = vsel %vm1187, %v1277, %v1258
        %v1279 = vrot.slane %v1258, 4
        %v1280 = vsel %vm1187, %v1264, %v1279
        %v1282 = vunpack.c.l.s4 1934713408
        %v1283 = vunpack.c.0.s8 %v1282
        %v1284 = vperm.slane %v1278, %v1283
        %v1286 = vunpack.c.l.s4 1934713408
        %v1287 = vunpack.c.0.s8 %v1286
        %v1288 = vperm.slane %v1280, %v1287
        %v1289 = vrot.slane %v1284, 4
        %v1290 = vsel %vm1187, %v1289, %v1272
        %v1291 = vrot.slane %v1272, 4
        %v1292 = vsel %vm1187, %v1284, %v1291
        %v1293 = vrot.slane %v1288, 4
        %v1294 = vsel %vm1187, %v1293, %v1276
        %v1295 = vrot.slane %v1276, 4
        %v1296 = vsel %vm1187, %v1288, %v1295
        %1298 = vrot.lane.b32.xlu0 %v1292, 8
        %v1299 = vpop.permute.xlu0 %1298
        %1302 = vrot.lane.b32.xlu0 %v1294, 16
        %v1303 = vpop.permute.xlu0 %1302
        %1306 = vrot.lane.b32.xlu0 %v1296, 24
        %v1307 = vpop.permute.xlu0 %1306
        %v1309 = vsel %vm980, %v1290, %v1299
        %vm1310 = vcmask 130048
        %v1311 = vsel %vm1310, %v1309, %v1303
        %vm1312 = vcmask 195584
        %v1313 = vsel %vm1312, %v1311, %v1307
        %v1314 = vpack.c.bf16 %v1313, %v1313
        %v1315 = vld [vmem:[%s4] sm:$0xf]
        %v1316 = vld [vmem:[%s4 + $0x4] sm:$0xf]
        %v1317 = vld [vmem:[%s4 + $0x8] sm:$0xf]
        %v1318 = vld [vmem:[%s4 + $0xc] sm:$0xf]
        %v1319 = vld [vmem:[%s5] sm:$0x1]
        %v1321 = vperm.slane %v1319, 0
        %v1327 = vunpack.c.l.b16 %v1315
        %v1328 = vunpack.c.l.b16 %v1316
        %v1329 = vunpack.c.l.b16 %v1317
        %v1330 = vunpack.c.l.b16 %v1318
        %v1331 = vpack.c.b16 %v1328, %v1327
        %v1332 = vpack.c.b16 %v1330, %v1329
        %v1336 = vsel %vm773, %v1314, 0
        %1338 = vmatpush.bf16.msra.mxu0 0
        %1339 = vmatpush.bf16.msra.mxu0 0
        %1340 = vmatpush.bf16.msra.mxu0 0
        %1341 = vmatpush.bf16.msra.mxu0 0
        %1342 = vmatpush.bf16.msra.mxu0 0
        %1343 = vmatpush.bf16.msra.mxu0 0
        %1344 = vmatpush.bf16.msra.mxu0 %v1332
        %1345 = vmatpush.bf16.msra.mxu0 %v1331
        %1346 = vmatmul.bf16.gmra.mxu0 %v1336
        %v1347 = vpop.f32.mrf.mxu0
        %v1348 = vadd.f32 %v1321, %v1347
        %v1349 = vpop.f32.mrf.mxu0
        %1350 = vdwg.mxu0
        %v1351 = vadd.f32 %v770, %v1348
        %v1352 = vld [vmem:[%s6] sm:$0x1]
        %v1353 = vld [vmem:[%s7] sm:$0x1]
        %v1354 = vsel %vm773, %v1351, 0.0
        %1355 = vadd.xlane.f32.xlu0 %v1354
        %v1356 = vpop.xlane.xlu0 %1355
        %v1357 = vmul.f32 %v1356, %v783
        %v1358 = vsub.f32 %v1351, %v1357
        %v1359 = vmul.f32 %v1358, %v1358
        %v1360 = vsel %vm773, %v1359, 0.0
        %1361 = vadd.xlane.f32.xlu0 %v1360
        %v1362 = vpop.xlane.xlu0 %1361
        %v1363 = vmul.f32 %v1362, %v783
        %v1364 = vadd.f32 %v1363, 1e-05
        %v1365 = vrsqrt.pop %v1364
        %v1366 = vmul.f32 %v1365, %v1364
        %v1367 = vmul.f32 %v1366, %v1365
        %v1368 = vmul.f32 0.5, %v1367
        %v1369 = vsub.f32 1.5, %v1368
        %v1370 = vmul.f32 %v1365, %v1369
        %vm1371 = vweird.f32 %v1364
        %vm1372 = vweird.f32 %v1365
        %vm1373 = vmor %vm1371, %vm1372
        %v1374 = vsel %vm1373, %v1365, %v1370
        %v1375 = vmul.f32 %v1358, %v1374
        %v1377 = vperm.slane %v1352, 0
        %v1379 = vmul.f32 %v1375, %v1377
        %v1381 = vperm.slane %v1353, 0
        %v1383 = vadd.f32 %v1379, %v1381
        %v1384 = vpack.c.bf16 %v1383, %v1383
        %v1385 = vld [vmem:[%s8] sm:$0xf]
        %v1386 = vld [vmem:[%s8 + $0x4] sm:$0xf]
        %v1387 = vld [vmem:[%s8 + $0x8] sm:$0xf]
        %v1388 = vld [vmem:[%s8 + $0xc] sm:$0xf]
        %v1389 = vld [vmem:[%s9] sm:$0x1]
        %v1391 = vperm.slane %v1389, 0
        %v1397 = vunpack.c.l.b16 %v1385
        %v1398 = vunpack.c.l.b16 %v1386
        %v1399 = vunpack.c.l.b16 %v1387
        %v1400 = vunpack.c.l.b16 %v1388
        %v1401 = vpack.c.b16 %v1398, %v1397
        %v1402 = vpack.c.b16 %v1400, %v1399
        %v1406 = vsel %vm773, %v1384, 0
        %1408 = vmatpush.bf16.msra.mxu0 0
        %1409 = vmatpush.bf16.msra.mxu0 0
        %1410 = vmatpush.bf16.msra.mxu0 0
        %1411 = vmatpush.bf16.msra.mxu0 0
        %1412 = vmatpush.bf16.msra.mxu0 0
        %1413 = vmatpush.bf16.msra.mxu0 0
        %1414 = vmatpush.bf16.msra.mxu0 %v1402
        %1415 = vmatpush.bf16.msra.mxu0 %v1401
        %1416 = vmatmul.bf16.gmra.mxu0 %v1406
        %v1417 = vpop.f32.mrf.mxu0
        %v1418 = vadd.f32 %v1391, %v1417
        %v1419 = vpop.f32.mrf.mxu0
        %1420 = vdwg.mxu0
        %v1421 = vmul.f32 %v1418, 0.5
        %v1422 = vmul.f32 %v1418, %v1418
        %v1423 = vmul.f32 %v1418, %v1422
        %v1424 = vmul.f32 %v1423, 0.044715
        %v1425 = vadd.f32 %v1418, %v1424
        %v1426 = vmul.f32 %v1425, 0.7978846
        %v1427 = vtanh.pop %v1426
        %v1428 = vadd.f32 %v1427, 1.0
        %v1429 = vmul.f32 %v1421, %v1428
        %v1430 = vpack.c.bf16 %v1429, %v1429
        %v1431 = vld [vmem:[%s10] sm:$0xf]
        %v1432 = vld [vmem:[%s10 + $0x4] sm:$0xf]
        %v1433 = vld [vmem:[%s10 + $0x8] sm:$0xf]
        %v1434 = vld [vmem:[%s10 + $0xc] sm:$0xf]
        %v1435 = vld [vmem:[%s10 + $0x10] sm:$0xf]
        %v1436 = vld [vmem:[%s10 + $0x14] sm:$0xf]
        %v1437 = vld [vmem:[%s10 + $0x18] sm:$0xf]
        %v1438 = vld [vmem:[%s10 + $0x1c] sm:$0xf]
        %v1439 = vld [vmem:[%s10 + $0x20] sm:$0xf]
        %v1440 = vld [vmem:[%s10 + $0x24] sm:$0xf]
        %v1441 = vld [vmem:[%s10 + $0x28] sm:$0xf]
        %v1442 = vld [vmem:[%s10 + $0x2c] sm:$0xf]
        %v1443 = vld [vmem:[%s10 + $0x30] sm:$0xf]
        %v1444 = vld [vmem:[%s10 + $0x34] sm:$0xf]
        %v1445 = vld [vmem:[%s10 + $0x38] sm:$0xf]
        %v1446 = vld [vmem:[%s10 + $0x3c] sm:$0xf]
        %v1447 = vld [vmem:[%s11] sm:$0x1]
        %v1449 = vperm.slane %v1447, 0
        %v1467 = vunpack.c.l.b16 %v1431
        %v1468 = vunpack.c.l.b16 %v1432
        %v1469 = vunpack.c.l.b16 %v1433
        %v1470 = vunpack.c.l.b16 %v1434
        %v1471 = vunpack.c.l.b16 %v1435
        %v1472 = vunpack.c.l.b16 %v1436
        %v1473 = vunpack.c.l.b16 %v1437
        %v1474 = vunpack.c.l.b16 %v1438
        %v1475 = vunpack.c.l.b16 %v1439
        %v1476 = vunpack.c.l.b16 %v1440
        %v1477 = vunpack.c.l.b16 %v1441
        %v1478 = vunpack.c.l.b16 %v1442
        %v1479 = vunpack.c.l.b16 %v1443
        %v1480 = vunpack.c.l.b16 %v1444
        %v1481 = vunpack.c.l.b16 %v1445
        %v1482 = vunpack.c.l.b16 %v1446
        %v1483 = vpack.c.b16 %v1468, %v1467
        %v1484 = vpack.c.b16 %v1470, %v1469
        %v1485 = vpack.c.b16 %v1472, %v1471
        %v1486 = vpack.c.b16 %v1474, %v1473
        %v1487 = vpack.c.b16 %v1476, %v1475
        %v1488 = vpack.c.b16 %v1478, %v1477
        %v1489 = vpack.c.b16 %v1480, %v1479
        %v1490 = vpack.c.b16 %v1482, %v1481
        %1499 = vmatpush.bf16.msra.mxu0 %v1490
        %1500 = vmatpush.bf16.msra.mxu0 %v1489
        %1501 = vmatpush.bf16.msra.mxu0 %v1488
        %1502 = vmatpush.bf16.msra.mxu0 %v1487
        %1503 = vmatpush.bf16.msra.mxu0 %v1486
        %1504 = vmatpush.bf16.msra.mxu0 %v1485
        %1505 = vmatpush.bf16.msra.mxu0 %v1484
        %1506 = vmatpush.bf16.msra.mxu0 %v1483
        %1507 = vmatmul.bf16.gmra.mxu0 %v1430
        %v1508 = vpop.f32.mrf.mxu0
        %v1509 = vadd.f32 %v1449, %v1508
        %v1510 = vpop.f32.mrf.mxu0
        %1511 = vdwg.mxu0
        %v1512 = vadd.f32 %v1351, %v1509
        %1513 = vst.msk [vmem:[%s418] sm:$0xff] %vm773, %v1512
        %s1514 = sand.u32 %s305, 1
        %s1515 = scalar_lea.sflag [#allocation5], %s1514
        %s1516 = sand.u32 %s305, 1
        %s1517 = smul.addr %s1516, 8
        %s1518 = scalar_lea.vmem [#allocation4], %s1517
        // Predicated region
        $region73: #{tpu_custom_call.1} parent=67 // pred_check
          %p1519 = pneg %p315
        $region74: #{tpu_custom_call.1} parent=67 // pred_check_branch
          %1521 = sbr.rel (%p1519) target = $region76
        $region75: #{tpu_custom_call.1} parent=67 // pred_region
          %1523 = vsyncadd %s1515, 0
          %s1524 = sadd.s32 %s31, %s30
          %s1525 = smul.addr %s1524, 8
          %s1526 = scalar_lea.hbm %s12, %s1525
          %s1528 = sshll.u32 %s1518, 4
          %s1529 = int_to_ptr.vmem [resolvable:$true] %s1528
          %s1530 = sshll.u32 %s1526, 4
          %s1531 = int_to_ptr.hbm [resolvable:$true] %s1530
          %1533 = dma.vmem_to_hbm [thread:$0]  %s1529, 128, %s1531, %s1515
        $region76: #{tpu_custom_call.1} parent=67 // pred_fallthru
          _
      $region68: #{tpu_custom_call.1} parent=5 // pred_fallthru
        _
      %p1534 = scmp.le.s32.totalorder 2, %s21
      // Predicated region
      $region77: #{tpu_custom_call.1} parent=5 // pred_check
        %p1535 = pneg %p1534
      $region78: #{tpu_custom_call.1} parent=5 // pred_check_branch
        %1537 = sbr.rel (%p1535) target = $region80
      $region79: #{tpu_custom_call.1} parent=5 // pred_region
        %s1538 = ssub.s32 %s21, 2
        // Predicated region
        $region81: #{tpu_custom_call.1} parent=79 // pred_check
          %p1539 = pneg %p321
        $region82: #{tpu_custom_call.1} parent=79 // pred_check_branch
          %1541 = sbr.rel (%p1539) target = $region84
        $region83: #{tpu_custom_call.1} parent=79 // pred_region
          %s1542 = sand.u32 %s306, 1
          %s1543 = scalar_lea.sflag [#allocation5], %s1542
          %s1544 = sand.u32 %s306, 1
          %s1545 = smul.addr %s1544, 8
          %s1546 = scalar_lea.vmem [#allocation4], %s1545
          %1548 = dma.done %s1543, 128
        $region84: #{tpu_custom_call.1} parent=79 // pred_fallthru
          _
      $region80: #{tpu_custom_call.1} parent=5 // pred_fallthru
        _
    $region6: #{tpu_custom_call.1} parent=1 // loop_footer
      %s25 = sadd.s32 1, %s21
    $region7: #{tpu_custom_call.1} parent=1 // loop_footer_branch
      %20 = sbr.rel target = $region3
    $region8: #{tpu_custom_call.1} parent=1 // loop_exit
      _
    %1549 = vsyncpa [#allocation5], 1
    %s1550 = scalar_lea.sflag [#allocation5], 1
    %1551 = vsyncpa %s1550, 1

</llo_original>
